<compile_context>
chip_gen: v6e
topology: v6e:2x2x1
jax: 0.10.0
libtpu: 0.0.40
codegen_flags: <defaults>
</compile_context>

<pallas_src>
import math
import functools

import jax
import jax.numpy as jnp
from jax.experimental import pallas as pl
from jax.experimental.pallas import tpu as pltpu

LN_EPS = 1e-12  # HF ViTConfig.layer_norm_eps default


def _layernorm(x, g, b, eps=LN_EPS):
    mu = jnp.mean(x, axis=-1, keepdims=True)
    var = jnp.mean((x - mu) ** 2, axis=-1, keepdims=True)
    return (x - mu) * jax.lax.rsqrt(var + eps) * g + b


# --------------------------------------------------------------------------------------
# Single fused kernel: embed (layer 0) -> L encoder layers -> classifier (last layer)
# --------------------------------------------------------------------------------------
def _vit_fused_kernel(patches_ref, pw_ref, econst_ref, bias_ref, fln_ref,
                      wall_ref, ball_ref,
                      w_in_ref, w2_ref, small_ref, b1_ref,
                      logits_ref, probs_ref, unc_ref,
                      h_ref, *,
                      num_heads, tokens_per_batch, batch_per_block):
    layer = pl.program_id(1)
    last_layer = pl.num_programs(1) - 1
    D = h_ref.shape[1]
    hd = D // num_heads
    scale = 1.0 / math.sqrt(hd)
    T_pad = tokens_per_batch
    Bb = batch_per_block

    # ---- layer 0: fused patch embedding + CLS prepend + positional embedding -----------
    # patches_ref already has pixels at token rows (CLS/pad rows zero), so this is a single
    # GEMM + add written once (no masked partial stores).  Pad rows stay exactly zero.
    @pl.when(layer == 0)
    def _():
        h_ref[...] = (jnp.dot(patches_ref[...], pw_ref[...],
                              preferred_element_type=jnp.float32)
                      + econst_ref[...])

    h = h_ref[...]                              # (Bb*T_pad, D) f32 residual stream
    sm = small_ref[0]                           # (9, D) f32: ln1_g,ln1_b,bq,bk,bv,bo,ln2_g,ln2_b,b2
    w_in = w_in_ref[0]                          # (D, 8D) bf16: [wq|wk|wv|wo|w1]
    bias = bias_ref[...]                        # (BT, BT) layer-invariant block-diag + pad mask

    # ---- self attention (pre-LN); bf16 MXU operands, f32 accumulation -------------------
    x = _layernorm(h, sm[0:1], sm[1:2]).astype(jnp.bfloat16)
    qkv = jnp.dot(x, w_in[:, 0:3 * D], preferred_element_type=jnp.float32)   # fused QKV GEMM
    q = qkv[:, 0:D] + sm[2:3]
    k = qkv[:, D:2 * D] + sm[3:4]
    v = qkv[:, 2 * D:3 * D] + sm[4:5]

    heads = []
    for hh in range(num_heads):                 # static unroll; head contexts stay in registers
        sl = slice(hh * hd, (hh + 1) * hd)
        qh = (q[:, sl] * scale).astype(jnp.bfloat16)
        kh = k[:, sl].astype(jnp.bfloat16)
        vh = v[:, sl].astype(jnp.bfloat16)
        s = jax.lax.dot_general(qh, kh, (((1,), (1,)), ((), ())),
                                preferred_element_type=jnp.float32) + bias    # (BT, BT)
        m = jnp.max(s, axis=-1, keepdims=True)
        p = jnp.exp(s - m)
        denom = jnp.sum(p, axis=-1, keepdims=True)
        # approx reciprocal (EUP): ~1e-3-level relative error in attention weights (inference-ok)
        a = (p * pl.reciprocal(denom, approx=True)).astype(jnp.bfloat16)
        heads.append(jnp.dot(a, vh, preferred_element_type=jnp.float32))
    ctx = jnp.concatenate(heads, axis=-1).astype(jnp.bfloat16)                # (BT, D), lane concat

    attn = jnp.dot(ctx, w_in[:, 3 * D:4 * D],
                   preferred_element_type=jnp.float32) + sm[5:6]
    h = h + attn

    # ---- MLP (pre-LN) --------------------------------------------------------------------
    x2 = _layernorm(h, sm[6:7], sm[7:8]).astype(jnp.bfloat16)
    # TODO(synk): HF ViT uses exact (erf) GELU; tanh approximation kept for guaranteed Mosaic
    # lowering (flip approximate=False to match the reference bit-for-bit where erf is supported).
    inter = jax.nn.gelu(
        jnp.dot(x2, w_in[:, 4 * D:8 * D], preferred_element_type=jnp.float32) + b1_ref[0],
        approximate=True)
    mlp = jnp.dot(inter.astype(jnp.bfloat16), w2_ref[0],
                  preferred_element_type=jnp.float32) + sm[8:9]
    h_new = h + mlp
    h_ref[...] = h_new                          # resident accumulator, never written to HBM

    # ---- last layer: final LN + folded classifier + dirichlet head ------------------------
    @pl.when(layer == last_layer)
    def _():
        cls_rows = [h_new[b * T_pad:b * T_pad + 1, :] for b in range(Bb)]
        xc = cls_rows[0] if Bb == 1 else jnp.concatenate(cls_rows, axis=0)    # (Bb, D)
        xn = _layernorm(xc, fln_ref[0:1, :], fln_ref[1:2, :])
        # single lane-dense (Bb,D)x(D,128) GEMM: cols 0-9 single-digit, 10-99 two-digit,
        # 100 absent, 101-127 zero padding.
        logits = jnp.dot(xn, wall_ref[...],
                         preferred_element_type=jnp.float32) + ball_ref[...]   # (Bb, 128)
        lane = jax.lax.broadcasted_iota(jnp.int32, logits.shape, 1)
        is_num = lane < 100
        # clamp before exp so overflow cannot produce inf/NaN (identical otherwise)
        alpha = jnp.where(is_num, jnp.exp(jnp.minimum(logits, 80.0)) + 1.0, 0.0)
        S = jnp.sum(alpha, axis=-1, keepdims=True)
        probs = jnp.where(is_num, alpha * pl.reciprocal(S, approx=False), 0.0)
        unc = jnp.broadcast_to(100.0 / S, logits.shape)

        rows_out = logits_ref.shape[0]
        if rows_out > Bb:
            pad = jnp.zeros((rows_out - Bb, 128), jnp.float32)
            logits_ref[...] = jnp.concatenate([logits, pad], axis=0)
            probs_ref[...] = jnp.concatenate([probs, pad], axis=0)
            unc_ref[...] = jnp.concatenate([unc, pad], axis=0)
        else:
            logits_ref[...] = logits
            probs_ref[...] = probs
            unc_ref[...] = unc


# --------------------------------------------------------------------------------------
# Parameter init (deterministic, synthetic — matches module shapes, not a checkpoint)
# --------------------------------------------------------------------------------------
def init_params(key, *, embed_dim, num_layers, image_size, patch_size, num_channels):
    D = embed_dim
    I = 4 * D
    L = num_layers
    patch_dim = num_channels * patch_size * patch_size
    num_patches = (image_size // patch_size) ** 2
    T = num_patches + 1

    keys = iter(jax.random.split(key, 16))

    def nrm(shape, dtype=jnp.float32, scale=0.02):
        return (scale * jax.random.normal(next(keys), shape)).astype(dtype)

    bf = jnp.bfloat16
    params = {
        "patch_w": nrm((patch_dim, D), bf),
        "patch_b": jnp.zeros((1, D), jnp.float32),
        "cls_token": nrm((1, D)),
        "pos_emb": nrm((T, D)),
        "final_ln_g": jnp.ones((1, D), jnp.float32),
        "final_ln_b": jnp.zeros((1, D), jnp.float32),
        # TiedDigitAwareClassifier (multiplicative embeddings init=ones, no per-digit bias)
        "cls_pos_emb": jnp.ones((3, D), jnp.float32),
        "pos_bias": jnp.zeros((3, 1), jnp.float32),
        "digit_w": nrm((D, 10)),
        "absent_w": nrm((D, 1)),
        "absent_b": jnp.zeros((1, 1), jnp.float32),
    }
    idx = jnp.arange(10, 100)
    params["tens_map"] = jax.nn.one_hot(idx // 10, 10, dtype=jnp.float32).T   # (10, 90)
    params["ones_map"] = jax.nn.one_hot(idx % 10, 10, dtype=jnp.float32).T    # (10, 90)

    # Per-layer weights pre-packed into DMA-friendly slabs, stacked along a leading L axis.
    wq = nrm((L, D, D), bf); wk = nrm((L, D, D), bf); wv = nrm((L, D, D), bf)
    wo = nrm((L, D, D), bf); w1 = nrm((L, D, I), bf); w2 = nrm((L, I, D), bf)
    small = jnp.stack([
        jnp.ones((L, D), jnp.float32),    # ln1_g
        jnp.zeros((L, D), jnp.float32),   # ln1_b
        jnp.zeros((L, D), jnp.float32),   # bq
        jnp.zeros((L, D), jnp.float32),   # bk
        jnp.zeros((L, D), jnp.float32),   # bv
        jnp.zeros((L, D), jnp.float32),   # bo
        jnp.ones((L, D), jnp.float32),    # ln2_g
        jnp.zeros((L, D), jnp.float32),   # ln2_b
        jnp.zeros((L, D), jnp.float32),   # b2
    ], axis=1)                            # (L, 9, D)
    params["layers"] = {
        "w_in": jnp.concatenate([wq, wk, wv, wo, w1], axis=2),   # (L, D, 8D) bf16
        "w2": w2,                                                # (L, I, D) bf16
        "small": small,                                          # (L, 9, D) f32
        "b1": jnp.zeros((L, 1, I), jnp.float32),                 # (L, 1, I) f32
    }
    return params


# --------------------------------------------------------------------------------------
# Forward pass (wrapper: data/param plumbing; all compute in ONE pallas_call)
# --------------------------------------------------------------------------------------
def vit_forward(params, x_nchw, *, patch_size, num_heads, num_batch_blocks=None):
    B, C, H, W = x_nchw.shape
    P = patch_size
    hp, wp = H // P, W // P
    N = hp * wp
    T = N + 1
    T_pad = ((T + 7) // 8) * 8                 # tokens per batch, padded to a sublane multiple
    D = params["patch_b"].shape[1]
    I = 4 * D
    L = params["layers"]["w2"].shape[0]
    CPP = C * P * P

    # batch-block ("parallel") grid axis: uses both TensorCores on v7x, near-free elsewhere.
    NB = num_batch_blocks
    if NB is None:
        NB = 2 if (B >= 2 and B % 2 == 0) else 1
    assert B % NB == 0
    Bb = B // NB
    BTb = Bb * T_pad
    out_rows = ((Bb + 7) // 8) * 8

    # patchify (NCHW -> per-patch (c, kh, kw) flatten, matching Conv2d weight flatten) and
    # place patches at their token rows: row 0 (CLS) and pad rows are zero.
    patches = (x_nchw.reshape(B, C, hp, P, wp, P)
               .transpose(0, 2, 4, 1, 3, 5)
               .reshape(B, N, CPP)).astype(jnp.bfloat16)
    patches_tok = jnp.concatenate(
        [jnp.zeros((B, 1, CPP), jnp.bfloat16), patches,
         jnp.zeros((B, T_pad - T, CPP), jnp.bfloat16)], axis=1).reshape(B * T_pad, CPP)

    # layer-invariant additive slab: CLS row = cls_token+pos[0]; patch rows = pos[i]+patch_b.
    econst_one = jnp.concatenate(
        [params["cls_token"] + params["pos_emb"][0:1],
         params["pos_emb"][1:1 + N] + params["patch_b"],
         jnp.zeros((T_pad - T, D), jnp.float32)], axis=0)             # (T_pad, D)
    econst = jnp.tile(econst_one, (Bb, 1))                            # (BTb, D)

    # block-diagonal attention bias (within-batch attention only, padded key columns masked),
    # hoisted out of the layer loop and fetched once by the kernel.
    # TODO(synk): for large Bb a batched (B,T,hd) dot_general avoids the O((Bb*T)^2) waste.
    r = jnp.arange(BTb)
    same = (r[:, None] // T_pad) == (r[None, :] // T_pad)
    col_real = (r[None, :] % T_pad) < T
    attn_bias = jnp.where(same & col_real, 0.0, -1e30).astype(jnp.float32)    # (BTb, BTb)

    # fold TiedDigitAwareClassifier + absent head into one lane-dense (D,128) GEMM (exact):
    # (x*pe)@wd == x@(pe[:,None]*wd); two-digit cols via the one-hot tens/ones maps.
    pe, wd, pb = params["cls_pos_emb"], params["digit_w"], params["pos_bias"]
    w_single = pe[0][:, None] * wd                                                     # (D, 10)
    w_hi = (pe[1][:, None] * wd) @ params["tens_map"] + (pe[2][:, None] * wd) @ params["ones_map"]
    w_all = jnp.concatenate([w_single, w_hi, params["absent_w"],
                             jnp.zeros((D, 27), jnp.float32)], axis=1)                 # (D, 128)
    b_all = jnp.concatenate([jnp.broadcast_to(pb[0:1, :], (1, 10)),
                             jnp.broadcast_to(pb[1:2, :] + pb[2:3, :], (1, 90)),
                             params["absent_b"],
                             jnp.zeros((1, 27), jnp.float32)], axis=1)                 # (1, 128)
    fln = jnp.concatenate([params["final_ln_g"], params["final_ln_b"]], axis=0)        # (2, D)

    lyr = params["layers"]
    out_spec = pl.BlockSpec((out_rows, 128), lambda b, l: (b, 0))
    out_sds = jax.ShapeDtypeStruct((NB * out_rows, 128), jnp.float32)

    logits_p, probs_p, unc_p = pl.pallas_call(
        functools.partial(_vit_fused_kernel, num_heads=num_heads,
                          tokens_per_batch=T_pad, batch_per_block=Bb),
        grid_spec=pltpu.PrefetchScalarGridSpec(
            num_scalar_prefetch=0,
            grid=(NB, L),
            in_specs=[
                pl.BlockSpec((BTb, CPP), lambda b, l: (b, 0)),        # patches at token rows
                pl.BlockSpec((CPP, D), lambda b, l: (0, 0)),          # patch embedding weight
                pl.BlockSpec((BTb, D), lambda b, l: (0, 0)),          # cls/pos/bias slab
                pl.BlockSpec((BTb, BTb), lambda b, l: (0, 0)),        # attention bias (resident)
                pl.BlockSpec((2, D), lambda b, l: (0, 0)),            # final LN gamma/beta
                pl.BlockSpec((D, 128), lambda b, l: (0, 0)),          # folded classifier weight
                pl.BlockSpec((1, 128), lambda b, l: (0, 0)),          # folded classifier bias
                pl.BlockSpec((1, D, 8 * D), lambda b, l: (l, 0, 0)),  # [wq|wk|wv|wo|w1] (bf16)
                pl.BlockSpec((1, I, D), lambda b, l: (l, 0, 0)),      # w2 (bf16)
                pl.BlockSpec((1, 9, D), lambda b, l: (l, 0, 0)),      # small f32 params
                pl.BlockSpec((1, 1, I), lambda b, l: (l, 0, 0)),      # b1
            ],
            out_specs=(out_spec, out_spec, out_spec),
            scratch_shapes=[pltpu.VMEM((BTb, D), jnp.float32)],       # resident residual stream
        ),
        out_shape=(out_sds, out_sds, out_sds),
        compiler_params=pltpu.CompilerParams(
            dimension_semantics=("parallel", "arbitrary")),
    )(patches_tok, params["patch_w"], econst, attn_bias, fln, w_all, b_all,
      lyr["w_in"], lyr["w2"], lyr["small"], lyr["b1"])

    def unpad(a):
        return a.reshape(NB, out_rows, 128)[:, :Bb].reshape(B, 128)

    logits = unpad(logits_p)
    probs = unpad(probs_p)
    unc = unpad(unc_p)
    # TODO(synk): use_time / use_size optional embeddings not implemented (module defaults False).
    return {
        "all_logits": logits[:, :101],       # (B, 101)
        "number_logits": logits[:, :100],    # (B, 100)
        "number_probs": probs[:, :100],      # (B, 100)
        "uncertainty": unc[:, 0],            # (B,)
    }


if __name__ == "__main__":
    # Small shapes consistent with the module: image_size=32, patch=16 -> 4 patches + CLS = 5
    # tokens (padded to 8), embed_dim=48 (divisible by 3 attention heads), 2 layers, batch=2.
    B, C, IMG, PATCH = 2, 3, 32, 16
    EMBED, LAYERS, HEADS = 48, 2, 3

    key = jax.random.PRNGKey(0)
    pkey, xkey = jax.random.split(key)
    params = init_params(pkey, embed_dim=EMBED, num_layers=LAYERS,
                         image_size=IMG, patch_size=PATCH, num_channels=C)
    x = jax.random.normal(xkey, (B, C, IMG, IMG), jnp.float32)

    fwd = jax.jit(functools.partial(vit_forward, patch_size=PATCH, num_heads=HEADS))
    out = fwd(params, x)
    jax.tree_util.tree_map(jax.block_until_ready, out)

    assert out["all_logits"].shape == (B, 101)
    assert out["number_logits"].shape == (B, 100)
    assert out["number_probs"].shape == (B, 100)
    assert out["uncertainty"].shape == (B,)
    assert bool(jnp.all(jnp.isfinite(out["all_logits"])))
    print("KERNEL_OK")
</pallas_src>

<mosaic_0001>
module attributes {stable_mosaic.version = 11 : i64} {
  func.func @_vit_fused_kernel(%arg0: i32, %arg1: i32, %arg2: memref<8x768xbf16, #tpu.memory_space<vmem>>, %arg3: memref<768x48xbf16, #tpu.memory_space<vmem>>, %arg4: memref<8x48xf32, #tpu.memory_space<vmem>>, %arg5: memref<8x8xf32, #tpu.memory_space<vmem>>, %arg6: memref<2x48xf32, #tpu.memory_space<vmem>>, %arg7: memref<48x128xf32, #tpu.memory_space<vmem>>, %arg8: memref<1x128xf32, #tpu.memory_space<vmem>>, %arg9: memref<1x48x384xbf16, #tpu.memory_space<vmem>>, %arg10: memref<1x192x48xbf16, #tpu.memory_space<vmem>>, %arg11: memref<1x9x48xf32, #tpu.memory_space<vmem>>, %arg12: memref<1x1x192xf32, #tpu.memory_space<vmem>>, %arg13: memref<8x128xf32, #tpu.memory_space<vmem>>, %arg14: memref<8x128xf32, #tpu.memory_space<vmem>>, %arg15: memref<8x128xf32, #tpu.memory_space<vmem>>, %arg16: memref<8x48xf32, #tpu.memory_space<vmem>>) attributes {dimension_semantics = [#tpu.dimension_semantics<parallel>, #tpu.dimension_semantics<arbitrary>], iteration_bounds = array<i64: 2, 2>, scalar_prefetch = 0 : i64, scratch_operands = 1 : i64, tpu.core_type = #tpu.core_type<tc>, window_params = [{transform_indices = @transform_0, window_bounds = array<i64: 8, 768>}, {pipeline_mode = #tpu.pipeline_mode<synchronous>, transform_indices = @transform_1, window_bounds = array<i64: 768, 48>}, {pipeline_mode = #tpu.pipeline_mode<synchronous>, transform_indices = @transform_2, window_bounds = array<i64: 8, 48>}, {pipeline_mode = #tpu.pipeline_mode<synchronous>, transform_indices = @transform_3, window_bounds = array<i64: 8, 8>}, {pipeline_mode = #tpu.pipeline_mode<synchronous>, transform_indices = @transform_4, window_bounds = array<i64: 2, 48>}, {pipeline_mode = #tpu.pipeline_mode<synchronous>, transform_indices = @transform_5, window_bounds = array<i64: 48, 128>}, {pipeline_mode = #tpu.pipeline_mode<synchronous>, transform_indices = @transform_6, window_bounds = array<i64: 1, 128>}, {transform_indices = @transform_7, window_bounds = array<i64: 1, 48, 384>}, {transform_indices = @transform_8, window_bounds = array<i64: 1, 192, 48>}, {transform_indices = @transform_9, window_bounds = array<i64: 1, 9, 48>}, {transform_indices = @transform_10, window_bounds = array<i64: 1, 1, 192>}, {transform_indices = @transform_11, window_bounds = array<i64: 8, 128>}, {transform_indices = @transform_12, window_bounds = array<i64: 8, 128>}, {transform_indices = @transform_13, window_bounds = array<i64: 8, 128>}]} {
    %c0_i32 = arith.constant 0 : i32
    %0 = arith.cmpi eq, %arg1, %c0_i32 : i32
    %1 = arith.extui %0 : i1 to i32
    %c0_i32_0 = arith.constant 0 : i32
    %2 = arith.cmpi ne, %1, %c0_i32_0 : i32
    scf.if %2 {
      %c0_51 = arith.constant 0 : index
      %c0_52 = arith.constant 0 : index
      %178 = vector.load %arg2[%c0_51, %c0_52] : memref<8x768xbf16, #tpu.memory_space<vmem>>, vector<8x768xbf16>
      %c0_53 = arith.constant 0 : index
      %c0_54 = arith.constant 0 : index
      %179 = vector.load %arg3[%c0_53, %c0_54] : memref<768x48xbf16, #tpu.memory_space<vmem>>, vector<768x48xbf16>
      %cst_55 = arith.constant dense<0.000000e+00> : vector<8x48xf32>
      %180 = tpu.matmul %178, %179, %cst_55 {dimension_numbers = #tpu.dot_dimension_numbers<[1], [0], [0], [1], [0, 0, 1, 1], [], []>} : vector<8x768xbf16>, vector<768x48xbf16>, vector<8x48xf32> -> vector<8x48xf32>
      %c0_56 = arith.constant 0 : index
      %c0_57 = arith.constant 0 : index
      %181 = vector.load %arg4[%c0_56, %c0_57] : memref<8x48xf32, #tpu.memory_space<vmem>>, vector<8x48xf32>
      %182 = arith.addf %180, %181 : vector<8x48xf32>
      %c0_58 = arith.constant 0 : index
      %c0_59 = arith.constant 0 : index
      %183 = vector.load %arg16[%c0_58, %c0_59] : memref<8x48xf32, #tpu.memory_space<vmem>>, vector<8x48xf32>
      tpu.vector_store %arg16[%c0_58, %c0_59], %182 {strides = array<i32>} : memref<8x48xf32, #tpu.memory_space<vmem>>, vector<8x48xf32>,
    } else {
    }
    %c0 = arith.constant 0 : index
    %c0_1 = arith.constant 0 : index
    %3 = vector.load %arg16[%c0, %c0_1] : memref<8x48xf32, #tpu.memory_space<vmem>>, vector<8x48xf32>
    %c0_2 = arith.constant 0 : index
    %c0_3 = arith.constant 0 : index
    %c0_4 = arith.constant 0 : index
    %4 = vector.load %arg11[%c0_2, %c0_3, %c0_4] : memref<1x9x48xf32, #tpu.memory_space<vmem>>, vector<1x9x48xf32>
    %5 = vector.shape_cast %4 : vector<1x9x48xf32> to vector<9x48xf32>
    %c0_5 = arith.constant 0 : index
    %c0_6 = arith.constant 0 : index
    %c0_7 = arith.constant 0 : index
    %6 = vector.load %arg9[%c0_5, %c0_6, %c0_7] : memref<1x48x384xbf16, #tpu.memory_space<vmem>>, vector<1x48x384xbf16>
    %7 = vector.shape_cast %6 : vector<1x48x384xbf16> to vector<48x384xbf16>
    %c0_8 = arith.constant 0 : index
    %c0_9 = arith.constant 0 : index
    %8 = vector.load %arg5[%c0_8, %c0_9] : memref<8x8xf32, #tpu.memory_space<vmem>>, vector<8x8xf32>
    %9 = vector.extract_strided_slice %5 {offsets = [0, 0], sizes = [1, 48], strides = [1, 1]} : vector<9x48xf32> to vector<1x48xf32>
    %10 = vector.extract_strided_slice %5 {offsets = [1, 0], sizes = [1, 48], strides = [1, 1]} : vector<9x48xf32> to vector<1x48xf32>
    %cst = arith.constant dense<0.000000e+00> : vector<8xf32>
    %11 = vector.multi_reduction <add>, %3, %cst [1] : vector<8x48xf32> to vector<8xf32>
    %12 = vector.shape_cast %11 : vector<8xf32> to vector<8x1xf32>
    %cst_10 = arith.constant 4.800000e+01 : f32
    %13 = vector.broadcast %cst_10 : f32 to vector<8x1xf32>
    %14 = arith.divf %12, %13 : vector<8x1xf32>
    %15 = vector.broadcast %14 : vector<8x1xf32> to vector<8x48xf32>
    %16 = arith.subf %3, %15 : vector<8x48xf32>
    %17 = arith.mulf %16, %16 : vector<8x48xf32>
    %cst_11 = arith.constant dense<0.000000e+00> : vector<8xf32>
    %18 = vector.multi_reduction <add>, %17, %cst_11 [1] : vector<8x48xf32> to vector<8xf32>
    %19 = vector.shape_cast %18 : vector<8xf32> to vector<8x1xf32>
    %cst_12 = arith.constant 4.800000e+01 : f32
    %20 = vector.broadcast %cst_12 : f32 to vector<8x1xf32>
    %21 = arith.divf %19, %20 : vector<8x1xf32>
    %22 = vector.broadcast %14 : vector<8x1xf32> to vector<8x48xf32>
    %23 = arith.subf %3, %22 : vector<8x48xf32>
    %cst_13 = arith.constant 9.99999996E-13 : f32
    %24 = vector.broadcast %cst_13 : f32 to vector<8x1xf32>
    %25 = arith.addf %21, %24 : vector<8x1xf32>
    %26 = math.rsqrt %25 : vector<8x1xf32>
    %27 = vector.broadcast %26 : vector<8x1xf32> to vector<8x48xf32>
    %28 = arith.mulf %23, %27 : vector<8x48xf32>
    %29 = vector.broadcast %9 : vector<1x48xf32> to vector<8x48xf32>
    %30 = arith.mulf %28, %29 : vector<8x48xf32>
    %31 = vector.broadcast %10 : vector<1x48xf32> to vector<8x48xf32>
    %32 = arith.addf %30, %31 : vector<8x48xf32>
    %33 = arith.truncf %32 : vector<8x48xf32> to vector<8x48xbf16>
    %34 = vector.extract_strided_slice %7 {offsets = [0, 0], sizes = [48, 144], strides = [1, 1]} : vector<48x384xbf16> to vector<48x144xbf16>
    %cst_14 = arith.constant dense<0.000000e+00> : vector<8x144xf32>
    %35 = tpu.matmul %33, %34, %cst_14 {dimension_numbers = #tpu.dot_dimension_numbers<[1], [0], [0], [1], [0, 0, 1, 1], [], []>} : vector<8x48xbf16>, vector<48x144xbf16>, vector<8x144xf32> -> vector<8x144xf32>
    %36 = vector.extract_strided_slice %35 {offsets = [0, 0], sizes = [8, 48], strides = [1, 1]} : vector<8x144xf32> to vector<8x48xf32>
    %37 = vector.extract_strided_slice %5 {offsets = [2, 0], sizes = [1, 48], strides = [1, 1]} : vector<9x48xf32> to vector<1x48xf32>
    %38 = vector.broadcast %37 : vector<1x48xf32> to vector<8x48xf32>
    %39 = arith.addf %36, %38 : vector<8x48xf32>
    %40 = vector.extract_strided_slice %35 {offsets = [0, 48], sizes = [8, 48], strides = [1, 1]} : vector<8x144xf32> to vector<8x48xf32>
    %41 = vector.extract_strided_slice %5 {offsets = [3, 0], sizes = [1, 48], strides = [1, 1]} : vector<9x48xf32> to vector<1x48xf32>
    %42 = vector.broadcast %41 : vector<1x48xf32> to vector<8x48xf32>
    %43 = arith.addf %40, %42 : vector<8x48xf32>
    %44 = vector.extract_strided_slice %35 {offsets = [0, 96], sizes = [8, 48], strides = [1, 1]} : vector<8x144xf32> to vector<8x48xf32>
    %45 = vector.extract_strided_slice %5 {offsets = [4, 0], sizes = [1, 48], strides = [1, 1]} : vector<9x48xf32> to vector<1x48xf32>
    %46 = vector.broadcast %45 : vector<1x48xf32> to vector<8x48xf32>
    %47 = arith.addf %44, %46 : vector<8x48xf32>
    %48 = vector.extract_strided_slice %39 {offsets = [0, 0], sizes = [8, 16], strides = [1, 1]} : vector<8x48xf32> to vector<8x16xf32>
    %cst_15 = arith.constant 2.500000e-01 : f32
    %49 = vector.broadcast %cst_15 : f32 to vector<8x16xf32>
    %50 = arith.mulf %48, %49 : vector<8x16xf32>
    %51 = arith.truncf %50 : vector<8x16xf32> to vector<8x16xbf16>
    %52 = vector.extract_strided_slice %43 {offsets = [0, 0], sizes = [8, 16], strides = [1, 1]} : vector<8x48xf32> to vector<8x16xf32>
    %53 = arith.truncf %52 : vector<8x16xf32> to vector<8x16xbf16>
    %54 = vector.extract_strided_slice %47 {offsets = [0, 0], sizes = [8, 16], strides = [1, 1]} : vector<8x48xf32> to vector<8x16xf32>
    %55 = arith.truncf %54 : vector<8x16xf32> to vector<8x16xbf16>
    %cst_16 = arith.constant dense<0.000000e+00> : vector<8x8xf32>
    %56 = tpu.matmul %51, %53, %cst_16 {dimension_numbers = #tpu.dot_dimension_numbers<[1], [1], [0], [0], [0, 0, 1, 0], [], []>} : vector<8x16xbf16>, vector<8x16xbf16>, vector<8x8xf32> -> vector<8x8xf32>
    %57 = arith.addf %56, %8 : vector<8x8xf32>
    %cst_17 = arith.constant dense<0xFF800000> : vector<8xf32>
    %58 = vector.multi_reduction <maximumf>, %57, %cst_17 [1] : vector<8x8xf32> to vector<8xf32>
    %59 = vector.shape_cast %58 : vector<8xf32> to vector<8x1xf32>
    %60 = vector.broadcast %59 : vector<8x1xf32> to vector<8x8xf32>
    %61 = arith.subf %57, %60 : vector<8x8xf32>
    %62 = math.exp %61 : vector<8x8xf32>
    %cst_18 = arith.constant dense<0.000000e+00> : vector<8xf32>
    %63 = vector.multi_reduction <add>, %62, %cst_18 [1] : vector<8x8xf32> to vector<8xf32>
    %64 = vector.shape_cast %63 : vector<8xf32> to vector<8x1xf32>
    %65 = tpu.reciprocal %64 {approx = true} : vector<8x1xf32> -> vector<8x1xf32>
    %66 = vector.broadcast %65 : vector<8x1xf32> to vector<8x8xf32>
    %67 = arith.mulf %62, %66 : vector<8x8xf32>
    %68 = arith.truncf %67 : vector<8x8xf32> to vector<8x8xbf16>
    %cst_19 = arith.constant dense<0.000000e+00> : vector<8x16xf32>
    %69 = tpu.matmul %68, %55, %cst_19 {dimension_numbers = #tpu.dot_dimension_numbers<[1], [0], [0], [1], [0, 0, 1, 1], [], []>} : vector<8x8xbf16>, vector<8x16xbf16>, vector<8x16xf32> -> vector<8x16xf32>
    %70 = vector.extract_strided_slice %39 {offsets = [0, 16], sizes = [8, 16], strides = [1, 1]} : vector<8x48xf32> to vector<8x16xf32>
    %cst_20 = arith.constant 2.500000e-01 : f32
    %71 = vector.broadcast %cst_20 : f32 to vector<8x16xf32>
    %72 = arith.mulf %70, %71 : vector<8x16xf32>
    %73 = arith.truncf %72 : vector<8x16xf32> to vector<8x16xbf16>
    %74 = vector.extract_strided_slice %43 {offsets = [0, 16], sizes = [8, 16], strides = [1, 1]} : vector<8x48xf32> to vector<8x16xf32>
    %75 = arith.truncf %74 : vector<8x16xf32> to vector<8x16xbf16>
    %76 = vector.extract_strided_slice %47 {offsets = [0, 16], sizes = [8, 16], strides = [1, 1]} : vector<8x48xf32> to vector<8x16xf32>
    %77 = arith.truncf %76 : vector<8x16xf32> to vector<8x16xbf16>
    %cst_21 = arith.constant dense<0.000000e+00> : vector<8x8xf32>
    %78 = tpu.matmul %73, %75, %cst_21 {dimension_numbers = #tpu.dot_dimension_numbers<[1], [1], [0], [0], [0, 0, 1, 0], [], []>} : vector<8x16xbf16>, vector<8x16xbf16>, vector<8x8xf32> -> vector<8x8xf32>
    %79 = arith.addf %78, %8 : vector<8x8xf32>
    %cst_22 = arith.constant dense<0xFF800000> : vector<8xf32>
    %80 = vector.multi_reduction <maximumf>, %79, %cst_22 [1] : vector<8x8xf32> to vector<8xf32>
    %81 = vector.shape_cast %80 : vector<8xf32> to vector<8x1xf32>
    %82 = vector.broadcast %81 : vector<8x1xf32> to vector<8x8xf32>
    %83 = arith.subf %79, %82 : vector<8x8xf32>
    %84 = math.exp %83 : vector<8x8xf32>
    %cst_23 = arith.constant dense<0.000000e+00> : vector<8xf32>
    %85 = vector.multi_reduction <add>, %84, %cst_23 [1] : vector<8x8xf32> to vector<8xf32>
    %86 = vector.shape_cast %85 : vector<8xf32> to vector<8x1xf32>
    %87 = tpu.reciprocal %86 {approx = true} : vector<8x1xf32> -> vector<8x1xf32>
    %88 = vector.broadcast %87 : vector<8x1xf32> to vector<8x8xf32>
    %89 = arith.mulf %84, %88 : vector<8x8xf32>
    %90 = arith.truncf %89 : vector<8x8xf32> to vector<8x8xbf16>
    %cst_24 = arith.constant dense<0.000000e+00> : vector<8x16xf32>
    %91 = tpu.matmul %90, %77, %cst_24 {dimension_numbers = #tpu.dot_dimension_numbers<[1], [0], [0], [1], [0, 0, 1, 1], [], []>} : vector<8x8xbf16>, vector<8x16xbf16>, vector<8x16xf32> -> vector<8x16xf32>
    %92 = vector.extract_strided_slice %39 {offsets = [0, 32], sizes = [8, 16], strides = [1, 1]} : vector<8x48xf32> to vector<8x16xf32>
    %cst_25 = arith.constant 2.500000e-01 : f32
    %93 = vector.broadcast %cst_25 : f32 to vector<8x16xf32>
    %94 = arith.mulf %92, %93 : vector<8x16xf32>
    %95 = arith.truncf %94 : vector<8x16xf32> to vector<8x16xbf16>
    %96 = vector.extract_strided_slice %43 {offsets = [0, 32], sizes = [8, 16], strides = [1, 1]} : vector<8x48xf32> to vector<8x16xf32>
    %97 = arith.truncf %96 : vector<8x16xf32> to vector<8x16xbf16>
    %98 = vector.extract_strided_slice %47 {offsets = [0, 32], sizes = [8, 16], strides = [1, 1]} : vector<8x48xf32> to vector<8x16xf32>
    %99 = arith.truncf %98 : vector<8x16xf32> to vector<8x16xbf16>
    %cst_26 = arith.constant dense<0.000000e+00> : vector<8x8xf32>
    %100 = tpu.matmul %95, %97, %cst_26 {dimension_numbers = #tpu.dot_dimension_numbers<[1], [1], [0], [0], [0, 0, 1, 0], [], []>} : vector<8x16xbf16>, vector<8x16xbf16>, vector<8x8xf32> -> vector<8x8xf32>
    %101 = arith.addf %100, %8 : vector<8x8xf32>
    %cst_27 = arith.constant dense<0xFF800000> : vector<8xf32>
    %102 = vector.multi_reduction <maximumf>, %101, %cst_27 [1] : vector<8x8xf32> to vector<8xf32>
    %103 = vector.shape_cast %102 : vector<8xf32> to vector<8x1xf32>
    %104 = vector.broadcast %103 : vector<8x1xf32> to vector<8x8xf32>
    %105 = arith.subf %101, %104 : vector<8x8xf32>
    %106 = math.exp %105 : vector<8x8xf32>
    %cst_28 = arith.constant dense<0.000000e+00> : vector<8xf32>
    %107 = vector.multi_reduction <add>, %106, %cst_28 [1] : vector<8x8xf32> to vector<8xf32>
    %108 = vector.shape_cast %107 : vector<8xf32> to vector<8x1xf32>
    %109 = tpu.reciprocal %108 {approx = true} : vector<8x1xf32> -> vector<8x1xf32>
    %110 = vector.broadcast %109 : vector<8x1xf32> to vector<8x8xf32>
    %111 = arith.mulf %106, %110 : vector<8x8xf32>
    %112 = arith.truncf %111 : vector<8x8xf32> to vector<8x8xbf16>
    %cst_29 = arith.constant dense<0.000000e+00> : vector<8x16xf32>
    %113 = tpu.matmul %112, %99, %cst_29 {dimension_numbers = #tpu.dot_dimension_numbers<[1], [0], [0], [1], [0, 0, 1, 1], [], []>} : vector<8x8xbf16>, vector<8x16xbf16>, vector<8x16xf32> -> vector<8x16xf32>
    %114 = tpu.concatenate %69, %91, %113 in 1 : vector<8x16xf32>, vector<8x16xf32>, vector<8x16xf32> -> vector<8x48xf32>
    %115 = arith.truncf %114 : vector<8x48xf32> to vector<8x48xbf16>
    %116 = vector.extract_strided_slice %7 {offsets = [0, 144], sizes = [48, 48], strides = [1, 1]} : vector<48x384xbf16> to vector<48x48xbf16>
    %cst_30 = arith.constant dense<0.000000e+00> : vector<8x48xf32>
    %117 = tpu.matmul %115, %116, %cst_30 {dimension_numbers = #tpu.dot_dimension_numbers<[1], [0], [0], [1], [0, 0, 1, 1], [], []>} : vector<8x48xbf16>, vector<48x48xbf16>, vector<8x48xf32> -> vector<8x48xf32>
    %118 = vector.extract_strided_slice %5 {offsets = [5, 0], sizes = [1, 48], strides = [1, 1]} : vector<9x48xf32> to vector<1x48xf32>
    %119 = vector.broadcast %118 : vector<1x48xf32> to vector<8x48xf32>
    %120 = arith.addf %117, %119 : vector<8x48xf32>
    %121 = arith.addf %3, %120 : vector<8x48xf32>
    %122 = vector.extract_strided_slice %5 {offsets = [6, 0], sizes = [1, 48], strides = [1, 1]} : vector<9x48xf32> to vector<1x48xf32>
    %123 = vector.extract_strided_slice %5 {offsets = [7, 0], sizes = [1, 48], strides = [1, 1]} : vector<9x48xf32> to vector<1x48xf32>
    %cst_31 = arith.constant dense<0.000000e+00> : vector<8xf32>
    %124 = vector.multi_reduction <add>, %121, %cst_31 [1] : vector<8x48xf32> to vector<8xf32>
    %125 = vector.shape_cast %124 : vector<8xf32> to vector<8x1xf32>
    %cst_32 = arith.constant 4.800000e+01 : f32
    %126 = vector.broadcast %cst_32 : f32 to vector<8x1xf32>
    %127 = arith.divf %125, %126 : vector<8x1xf32>
    %128 = vector.broadcast %127 : vector<8x1xf32> to vector<8x48xf32>
    %129 = arith.subf %121, %128 : vector<8x48xf32>
    %130 = arith.mulf %129, %129 : vector<8x48xf32>
    %cst_33 = arith.constant dense<0.000000e+00> : vector<8xf32>
    %131 = vector.multi_reduction <add>, %130, %cst_33 [1] : vector<8x48xf32> to vector<8xf32>
    %132 = vector.shape_cast %131 : vector<8xf32> to vector<8x1xf32>
    %cst_34 = arith.constant 4.800000e+01 : f32
    %133 = vector.broadcast %cst_34 : f32 to vector<8x1xf32>
    %134 = arith.divf %132, %133 : vector<8x1xf32>
    %135 = vector.broadcast %127 : vector<8x1xf32> to vector<8x48xf32>
    %136 = arith.subf %121, %135 : vector<8x48xf32>
    %cst_35 = arith.constant 9.99999996E-13 : f32
    %137 = vector.broadcast %cst_35 : f32 to vector<8x1xf32>
    %138 = arith.addf %134, %137 : vector<8x1xf32>
    %139 = math.rsqrt %138 : vector<8x1xf32>
    %140 = vector.broadcast %139 : vector<8x1xf32> to vector<8x48xf32>
    %141 = arith.mulf %136, %140 : vector<8x48xf32>
    %142 = vector.broadcast %122 : vector<1x48xf32> to vector<8x48xf32>
    %143 = arith.mulf %141, %142 : vector<8x48xf32>
    %144 = vector.broadcast %123 : vector<1x48xf32> to vector<8x48xf32>
    %145 = arith.addf %143, %144 : vector<8x48xf32>
    %146 = arith.truncf %145 : vector<8x48xf32> to vector<8x48xbf16>
    %147 = vector.extract_strided_slice %7 {offsets = [0, 192], sizes = [48, 192], strides = [1, 1]} : vector<48x384xbf16> to vector<48x192xbf16>
    %cst_36 = arith.constant dense<0.000000e+00> : vector<8x192xf32>
    %148 = tpu.matmul %146, %147, %cst_36 {dimension_numbers = #tpu.dot_dimension_numbers<[1], [0], [0], [1], [0, 0, 1, 1], [], []>} : vector<8x48xbf16>, vector<48x192xbf16>, vector<8x192xf32> -> vector<8x192xf32>
    %c0_37 = arith.constant 0 : index
    %c0_38 = arith.constant 0 : index
    %c0_39 = arith.constant 0 : index
    %149 = vector.load %arg12[%c0_37, %c0_38, %c0_39] : memref<1x1x192xf32, #tpu.memory_space<vmem>>, vector<1x1x192xf32>
    %150 = vector.shape_cast %149 : vector<1x1x192xf32> to vector<1x192xf32>
    %151 = vector.broadcast %150 : vector<1x192xf32> to vector<8x192xf32>
    %152 = arith.addf %148, %151 : vector<8x192xf32>
    %153 = arith.mulf %152, %152 : vector<8x192xf32>
    %154 = arith.mulf %152, %153 : vector<8x192xf32>
    %cst_40 = arith.constant 4.471500e-02 : f32
    %155 = vector.broadcast %cst_40 : f32 to vector<8x192xf32>
    %156 = arith.mulf %155, %154 : vector<8x192xf32>
    %157 = arith.addf %152, %156 : vector<8x192xf32>
    %cst_41 = arith.constant 0.797884583 : f32
    %158 = vector.broadcast %cst_41 : f32 to vector<8x192xf32>
    %159 = arith.mulf %158, %157 : vector<8x192xf32>
    %160 = math.tanh %159 : vector<8x192xf32>
    %cst_42 = arith.constant 1.000000e+00 : f32
    %161 = vector.broadcast %cst_42 : f32 to vector<8x192xf32>
    %162 = arith.addf %161, %160 : vector<8x192xf32>
    %cst_43 = arith.constant 5.000000e-01 : f32
    %163 = vector.broadcast %cst_43 : f32 to vector<8x192xf32>
    %164 = arith.mulf %163, %162 : vector<8x192xf32>
    %165 = arith.mulf %152, %164 : vector<8x192xf32>
    %166 = arith.truncf %165 : vector<8x192xf32> to vector<8x192xbf16>
    %c0_44 = arith.constant 0 : index
    %c0_45 = arith.constant 0 : index
    %c0_46 = arith.constant 0 : index
    %167 = vector.load %arg10[%c0_44, %c0_45, %c0_46] : memref<1x192x48xbf16, #tpu.memory_space<vmem>>, vector<1x192x48xbf16>
    %168 = vector.shape_cast %167 : vector<1x192x48xbf16> to vector<192x48xbf16>
    %cst_47 = arith.constant dense<0.000000e+00> : vector<8x48xf32>
    %169 = tpu.matmul %166, %168, %cst_47 {dimension_numbers = #tpu.dot_dimension_numbers<[1], [0], [0], [1], [0, 0, 1, 1], [], []>} : vector<8x192xbf16>, vector<192x48xbf16>, vector<8x48xf32> -> vector<8x48xf32>
    %170 = vector.extract_strided_slice %5 {offsets = [8, 0], sizes = [1, 48], strides = [1, 1]} : vector<9x48xf32> to vector<1x48xf32>
    %171 = vector.broadcast %170 : vector<1x48xf32> to vector<8x48xf32>
    %172 = arith.addf %169, %171 : vector<8x48xf32>
    %173 = arith.addf %121, %172 : vector<8x48xf32>
    %c0_48 = arith.constant 0 : index
    %c0_49 = arith.constant 0 : index
    %174 = vector.load %arg16[%c0_48, %c0_49] : memref<8x48xf32, #tpu.memory_space<vmem>>, vector<8x48xf32>
    tpu.vector_store %arg16[%c0_48, %c0_49], %173 {strides = array<i32>} : memref<8x48xf32, #tpu.memory_space<vmem>>, vector<8x48xf32>,
    %c1_i32 = arith.constant 1 : i32
    %175 = arith.cmpi eq, %arg1, %c1_i32 : i32
    %176 = arith.extui %175 : i1 to i32
    %c0_i32_50 = arith.constant 0 : i32
    %177 = arith.cmpi ne, %176, %c0_i32_50 : i32
    scf.if %177 {
      %178 = vector.extract_strided_slice %173 {offsets = [0, 0], sizes = [1, 48], strides = [1, 1]} : vector<8x48xf32> to vector<1x48xf32>
      %c0_51 = arith.constant 0 : index
      %c0_52 = arith.constant 0 : index
      %179 = vector.load %arg6[%c0_51, %c0_52] : memref<2x48xf32, #tpu.memory_space<vmem>>, vector<1x48xf32>
      %c1 = arith.constant 1 : index
      %c0_53 = arith.constant 0 : index
      %180 = vector.load %arg6[%c1, %c0_53] : memref<2x48xf32, #tpu.memory_space<vmem>>, vector<1x48xf32>
      %cst_54 = arith.constant dense<0.000000e+00> : vector<1xf32>
      %181 = vector.multi_reduction <add>, %178, %cst_54 [1] : vector<1x48xf32> to vector<1xf32>
      %182 = vector.shape_cast %181 : vector<1xf32> to vector<1x1xf32>
      %cst_55 = arith.constant 4.800000e+01 : f32
      %183 = vector.broadcast %cst_55 : f32 to vector<1x1xf32>
      %184 = arith.divf %182, %183 : vector<1x1xf32>
      %185 = vector.broadcast %184 : vector<1x1xf32> to vector<1x48xf32>
      %186 = arith.subf %178, %185 : vector<1x48xf32>
      %187 = arith.mulf %186, %186 : vector<1x48xf32>
      %cst_56 = arith.constant dense<0.000000e+00> : vector<1xf32>
      %188 = vector.multi_reduction <add>, %187, %cst_56 [1] : vector<1x48xf32> to vector<1xf32>
      %189 = vector.shape_cast %188 : vector<1xf32> to vector<1x1xf32>
      %cst_57 = arith.constant 4.800000e+01 : f32
      %190 = vector.broadcast %cst_57 : f32 to vector<1x1xf32>
      %191 = arith.divf %189, %190 : vector<1x1xf32>
      %192 = vector.broadcast %184 : vector<1x1xf32> to vector<1x48xf32>
      %193 = arith.subf %178, %192 : vector<1x48xf32>
      %cst_58 = arith.constant 9.99999996E-13 : f32
      %194 = vector.broadcast %cst_58 : f32 to vector<1x1xf32>
      %195 = arith.addf %191, %194 : vector<1x1xf32>
      %196 = math.rsqrt %195 : vector<1x1xf32>
      %197 = vector.broadcast %196 : vector<1x1xf32> to vector<1x48xf32>
      %198 = arith.mulf %193, %197 : vector<1x48xf32>
      %199 = arith.mulf %198, %179 : vector<1x48xf32>
      %200 = arith.addf %199, %180 : vector<1x48xf32>
      %c0_59 = arith.constant 0 : index
      %c0_60 = arith.constant 0 : index
      %201 = vector.load %arg7[%c0_59, %c0_60] : memref<48x128xf32, #tpu.memory_space<vmem>>, vector<48x128xf32>
      %cst_61 = arith.constant dense<0.000000e+00> : vector<1x128xf32>
      %202 = tpu.matmul %200, %201, %cst_61 {dimension_numbers = #tpu.dot_dimension_numbers<[1], [0], [0], [1], [0, 0, 1, 1], [], []>} : vector<1x48xf32>, vector<48x128xf32>, vector<1x128xf32> -> vector<1x128xf32>
      %c0_62 = arith.constant 0 : index
      %c0_63 = arith.constant 0 : index
      %203 = vector.load %arg8[%c0_62, %c0_63] : memref<1x128xf32, #tpu.memory_space<vmem>>, vector<1x128xf32>
      %204 = arith.addf %202, %203 : vector<1x128xf32>
      %205 = tpu.iota {dimensions = array<i32: 1>} : vector<1x128xi32>
      %c100_i32 = arith.constant 100 : i32
      %206 = vector.broadcast %c100_i32 : i32 to vector<1x128xi32>
      %207 = arith.cmpi slt, %205, %206 : vector<1x128xi32>
      %cst_64 = arith.constant 8.000000e+01 : f32
      %208 = vector.broadcast %cst_64 : f32 to vector<1x128xf32>
      %209 = arith.minimumf %204, %208 : vector<1x128xf32>
      %210 = math.exp %209 : vector<1x128xf32>
      %cst_65 = arith.constant 1.000000e+00 : f32
      %211 = vector.broadcast %cst_65 : f32 to vector<1x128xf32>
      %212 = arith.addf %210, %211 : vector<1x128xf32>
      %cst_66 = arith.constant 0.000000e+00 : f32
      %213 = vector.broadcast %cst_66 : f32 to vector<1x128xf32>
      %214 = arith.select %207, %212, %213 : vector<1x128xi1>, vector<1x128xf32>
      %cst_67 = arith.constant dense<0.000000e+00> : vector<1xf32>
      %215 = vector.multi_reduction <add>, %214, %cst_67 [1] : vector<1x128xf32> to vector<1xf32>
      %216 = vector.shape_cast %215 : vector<1xf32> to vector<1x1xf32>
      %217 = tpu.reciprocal %216 : vector<1x1xf32> -> vector<1x1xf32>
      %218 = vector.broadcast %217 : vector<1x1xf32> to vector<1x128xf32>
      %219 = arith.mulf %214, %218 : vector<1x128xf32>
      %cst_68 = arith.constant 0.000000e+00 : f32
      %220 = vector.broadcast %cst_68 : f32 to vector<1x128xf32>
      %221 = arith.select %207, %219, %220 : vector<1x128xi1>, vector<1x128xf32>
      %cst_69 = arith.constant 1.000000e+02 : f32
      %222 = vector.broadcast %cst_69 : f32 to vector<1x1xf32>
      %223 = arith.divf %222, %216 : vector<1x1xf32>
      %224 = vector.shape_cast %223 : vector<1x1xf32> to vector<1x1xf32>
      %225 = vector.broadcast %224 : vector<1x1xf32> to vector<1x128xf32>
      %cst_70 = arith.constant 0.000000e+00 : f32
      %226 = vector.broadcast %cst_70 : f32 to vector<7x128xf32>
      %227 = tpu.concatenate %204, %226 in 0 : vector<1x128xf32>, vector<7x128xf32> -> vector<8x128xf32>
      %c0_71 = arith.constant 0 : index
      %c0_72 = arith.constant 0 : index
      %228 = vector.load %arg13[%c0_71, %c0_72] : memref<8x128xf32, #tpu.memory_space<vmem>>, vector<8x128xf32>
      tpu.vector_store %arg13[%c0_71, %c0_72], %227 {strides = array<i32>} : memref<8x128xf32, #tpu.memory_space<vmem>>, vector<8x128xf32>,
      %229 = tpu.concatenate %221, %226 in 0 : vector<1x128xf32>, vector<7x128xf32> -> vector<8x128xf32>
      %c0_73 = arith.constant 0 : index
      %c0_74 = arith.constant 0 : index
      %230 = vector.load %arg14[%c0_73, %c0_74] : memref<8x128xf32, #tpu.memory_space<vmem>>, vector<8x128xf32>
      tpu.vector_store %arg14[%c0_73, %c0_74], %229 {strides = array<i32>} : memref<8x128xf32, #tpu.memory_space<vmem>>, vector<8x128xf32>,
      %231 = tpu.concatenate %225, %226 in 0 : vector<1x128xf32>, vector<7x128xf32> -> vector<8x128xf32>
      %c0_75 = arith.constant 0 : index
      %c0_76 = arith.constant 0 : index
      %232 = vector.load %arg15[%c0_75, %c0_76] : memref<8x128xf32, #tpu.memory_space<vmem>>, vector<8x128xf32>
      tpu.vector_store %arg15[%c0_75, %c0_76], %231 {strides = array<i32>} : memref<8x128xf32, #tpu.memory_space<vmem>>, vector<8x128xf32>,
    } else {
    }
    return
  }
  func.func @transform_0(%arg0: i32, %arg1: i32) -> (i32, i32) {
    %c0_i32 = arith.constant 0 : i32
    %c0_i32_0 = arith.constant 0 : i32
    return %arg0, %c0_i32 : i32, i32
  }
  func.func @transform_1(%arg0: i32, %arg1: i32) -> (i32, i32) {
    %c0_i32 = arith.constant 0 : i32
    %c0_i32_0 = arith.constant 0 : i32
    %c0_i32_1 = arith.constant 0 : i32
    return %c0_i32, %c0_i32_0 : i32, i32
  }
  func.func @transform_2(%arg0: i32, %arg1: i32) -> (i32, i32) {
    %c0_i32 = arith.constant 0 : i32
    %c0_i32_0 = arith.constant 0 : i32
    %c0_i32_1 = arith.constant 0 : i32
    return %c0_i32, %c0_i32_0 : i32, i32
  }
  func.func @transform_3(%arg0: i32, %arg1: i32) -> (i32, i32) {
    %c0_i32 = arith.constant 0 : i32
    %c0_i32_0 = arith.constant 0 : i32
    %c0_i32_1 = arith.constant 0 : i32
    return %c0_i32, %c0_i32_0 : i32, i32
  }
  func.func @transform_4(%arg0: i32, %arg1: i32) -> (i32, i32) {
    %c0_i32 = arith.constant 0 : i32
    %c0_i32_0 = arith.constant 0 : i32
    %c0_i32_1 = arith.constant 0 : i32
    return %c0_i32, %c0_i32_0 : i32, i32
  }
  func.func @transform_5(%arg0: i32, %arg1: i32) -> (i32, i32) {
    %c0_i32 = arith.constant 0 : i32
    %c0_i32_0 = arith.constant 0 : i32
    %c0_i32_1 = arith.constant 0 : i32
    return %c0_i32, %c0_i32_0 : i32, i32
  }
  func.func @transform_6(%arg0: i32, %arg1: i32) -> (i32, i32) {
    %c0_i32 = arith.constant 0 : i32
    %c0_i32_0 = arith.constant 0 : i32
    %c0_i32_1 = arith.constant 0 : i32
    return %c0_i32, %c0_i32_0 : i32, i32
  }
  func.func @transform_7(%arg0: i32, %arg1: i32) -> (i32, i32, i32) {
    %c0_i32 = arith.constant 0 : i32
    %c0_i32_0 = arith.constant 0 : i32
    %c0_i32_1 = arith.constant 0 : i32
    return %arg1, %c0_i32, %c0_i32_0 : i32, i32, i32
  }
  func.func @transform_8(%arg0: i32, %arg1: i32) -> (i32, i32, i32) {
    %c0_i32 = arith.constant 0 : i32
    %c0_i32_0 = arith.constant 0 : i32
    %c0_i32_1 = arith.constant 0 : i32
    return %arg1, %c0_i32, %c0_i32_0 : i32, i32, i32
  }
  func.func @transform_9(%arg0: i32, %arg1: i32) -> (i32, i32, i32) {
    %c0_i32 = arith.constant 0 : i32
    %c0_i32_0 = arith.constant 0 : i32
    %c0_i32_1 = arith.constant 0 : i32
    return %arg1, %c0_i32, %c0_i32_0 : i32, i32, i32
  }
  func.func @transform_10(%arg0: i32, %arg1: i32) -> (i32, i32, i32) {
    %c0_i32 = arith.constant 0 : i32
    %c0_i32_0 = arith.constant 0 : i32
    %c0_i32_1 = arith.constant 0 : i32
    return %arg1, %c0_i32, %c0_i32_0 : i32, i32, i32
  }
  func.func @transform_11(%arg0: i32, %arg1: i32) -> (i32, i32) {
    %c0_i32 = arith.constant 0 : i32
    %c0_i32_0 = arith.constant 0 : i32
    return %arg0, %c0_i32 : i32, i32
  }
  func.func @transform_12(%arg0: i32, %arg1: i32) -> (i32, i32) {
    %c0_i32 = arith.constant 0 : i32
    %c0_i32_0 = arith.constant 0 : i32
    return %arg0, %c0_i32 : i32, i32
  }
  func.func @transform_13(%arg0: i32, %arg1: i32) -> (i32, i32) {
    %c0_i32 = arith.constant 0 : i32
    %c0_i32_0 = arith.constant 0 : i32
    return %arg0, %c0_i32 : i32, i32
  }
}

</mosaic_0001>

<llo_original>
// kernel: vit_forward.1
$region0: #{vit_forward.1}
  #allocation0 [shape = 'u32[]', space=smem, size = 0x4, offset = 0x4, fixed_abs, tag = 'smem constant byte address 0x4 - core index']
  #allocation1 [shape = 'u32[144,128]{1,0:T(1,128)}', space=vmem, size = 0x12000, scoped, tag = 'internal scratch']
  #allocation2 [shape = 'f32[8,48]{1,0:T(8,128)}', space=vmem, size = 0x1000, scoped, tag = 'scratch operand']
  %s0 = inlined_call_operand.vmem [shape: bf16[16,768], index: 0, kind: input, shape index: {}]
  %s1 = inlined_call_operand.vmem [shape: bf16[768,48], index: 1, kind: input, shape index: {}]
  %s2 = inlined_call_operand.vmem [shape: f32[8,48], index: 2, kind: input, shape index: {}]
  %s3 = inlined_call_operand.vmem [shape: f32[8,8], index: 3, kind: input, shape index: {}]
  %s4 = inlined_call_operand.vmem [shape: f32[2,48], index: 4, kind: input, shape index: {}]
  %s5 = inlined_call_operand.vmem [shape: f32[48,128], index: 5, kind: input, shape index: {}]
  %s6 = inlined_call_operand.vmem [shape: f32[1,128], index: 6, kind: input, shape index: {}]
  %s7 = inlined_call_operand.vmem [shape: bf16[2,48,384], index: 7, kind: input, shape index: {}]
  %s8 = inlined_call_operand.vmem [shape: bf16[2,192,48], index: 8, kind: input, shape index: {}]
  %s9 = inlined_call_operand.vmem [shape: f32[2,9,48], index: 9, kind: input, shape index: {}]
  %s10 = inlined_call_operand.vmem [shape: f32[2,1,192], index: 10, kind: input, shape index: {}]
  %s11 = inlined_call_operand.vmem [shape: f32[16,128], index: 11, kind: output, shape index: {0}]
  %s12 = inlined_call_operand.vmem [shape: f32[16,128], index: 12, kind: output, shape index: {1}]
  %s13 = inlined_call_operand.vmem [shape: f32[16,128], index: 13, kind: output, shape index: {2}]
  %14 = xla_tuple %s11, %s12, %s13
  %s15 = sld [smem:[#allocation0]]
  $region101: #{vit_forward.1} parent=0
    _
  %s17 = ssub.s32 1, %s15
  %s18 = scalar_select 0, %s17, %s15
  loop: start=0, step=1, limit=6
  $region2: #{vit_forward.1} parent=0 // loop_pre_header
    _
  $region3: #{vit_forward.1} parent=0 // loop_header
    %s20 = sphi 0, %s24
    %p21 = scmp.ge.s32.totalorder %s20, 6
    %s27 = sphi 0, %s39
    %s28 = sphi 0, %s35
    %s29 = sphi 0, %s27
    %s30 = sphi 0, %s28
    %s31 = sphi 0, %s29
    %s32 = sphi 0, %s30
    %s42 = sphi 0, %s44
    %s45 = sphi 0, %s42
    %s46 = sphi 0, %s45
    %s62 = sphi 0, %s46
    %s66 = sphi 0, %s66
    %s68 = sphi 0, %s66
    %s69 = sphi 0, %s68
    %s83 = sphi 0, %s69
    %s87 = sphi 0, %s87
    %s89 = sphi 0, %s87
    %s90 = sphi 0, %s89
    %s104 = sphi 0, %s90
    %s108 = sphi 0, %s108
    %s110 = sphi 0, %s108
    %s111 = sphi 0, %s110
    %s125 = sphi 0, %s111
    %s129 = sphi 0, %s129
    %s131 = sphi 0, %s129
    %s132 = sphi 0, %s131
    %s146 = sphi 0, %s132
    %s150 = sphi 0, %s150
    %s152 = sphi 0, %s150
    %s153 = sphi 0, %s152
    %s167 = sphi 0, %s153
    %s171 = sphi 0, %s171
    %s173 = sphi 0, %s171
    %s174 = sphi 0, %s173
    %s188 = sphi 0, %s174
    %s194 = sphi 0, %s196
    %s197 = sphi 0, %s194
    %s198 = sphi 0, %s197
    %s214 = sphi 0, %s198
    %s220 = sphi 0, %s222
    %s223 = sphi 0, %s220
    %s224 = sphi 0, %s223
    %s240 = sphi 0, %s224
    %s246 = sphi 0, %s248
    %s249 = sphi 0, %s246
    %s250 = sphi 0, %s249
    %s266 = sphi 0, %s250
    %s272 = sphi 0, %s274
    %s275 = sphi 0, %s272
    %s276 = sphi 0, %s275
    %s292 = sphi 0, %s276
    %s298 = sphi 0, %s300
    %s301 = sphi 0, %s298
    %s302 = sphi 0, %s301
    %s318 = sphi 0, %s302
    %s324 = sphi 0, %s326
    %s327 = sphi 0, %s324
    %s328 = sphi 0, %s327
    %s344 = sphi 0, %s328
    %s350 = sphi 0, %s352
    %s353 = sphi 0, %s350
    %s354 = sphi 0, %s353
    %s370 = sphi 0, %s354
  $region4: #{vit_forward.1} parent=0 // loop_header_branch
    %23 = sbr.rel (%p21) target = $region8
  $region5: #{vit_forward.1} parent=0 // loop_body
    %s25 = ssub.s32 %s20, 1
    %s26 = ssub.s32 %s20, 2
    %s33 = sadd.s32 1, %s28
    %p34 = scmp.ge.s32.totalorder %s33, 2
    %s35 = scalar_select %p34, 0, %s33
    %s36 = sadd.s32 1, %s27
    %s37 = scalar_select %p34, %s36, %s27
    %p38 = scmp.ge.s32.totalorder %s37, 2
    %s39 = scalar_select %p38, 0, %s37
    %s40 = ssub.s32 %s27, %s39
    %p41 = scmp.eq.s32.totalorder %s40, 0
    %s43 = sadd.s32 %s42, 1
    %s44 = scalar_select %p41, %s42, %s43
    %p47 = pneg %p41
    %p48 = scmp.eq.s32.totalorder %s20, 3
    %p49 = por %p47, %p48
    %p50 = scmp.ne.s32.totalorder %s42, %s45
    %p51 = scmp.eq.s32.totalorder %s20, 0
    %p52 = por %p50, %p51
    %p53 = scmp.ne.s32.totalorder %s42, %s45
    %p54 = scmp.eq.s32.totalorder %s25, 3
    %p55 = por %p53, %p54
    %p56 = scmp.ne.s32.totalorder %s45, %s46
    %p57 = scmp.eq.s32.totalorder %s25, 0
    %p58 = por %p56, %p57
    %p59 = scmp.ne.s32.totalorder %s45, %s46
    %p60 = scmp.eq.s32.totalorder %s26, 3
    %p61 = por %p59, %p60
    %p63 = scmp.ne.s32.totalorder %s46, %s62
    %p64 = scmp.eq.s32.totalorder %s26, 0
    %p65 = por %p63, %p64
    %s67 = sadd.s32 %s66, 1
    %p70 = scmp.eq.s32.totalorder %s20, 3
    %p71 = scmp.ne.s32.totalorder %s66, %s68
    %p72 = scmp.eq.s32.totalorder %s20, 0
    %p73 = por %p71, %p72
    %p74 = scmp.ne.s32.totalorder %s66, %s68
    %p75 = scmp.eq.s32.totalorder %s25, 3
    %p76 = por %p74, %p75
    %p77 = scmp.ne.s32.totalorder %s68, %s69
    %p78 = scmp.eq.s32.totalorder %s25, 0
    %p79 = por %p77, %p78
    %p80 = scmp.ne.s32.totalorder %s68, %s69
    %p81 = scmp.eq.s32.totalorder %s26, 3
    %p82 = por %p80, %p81
    %p84 = scmp.ne.s32.totalorder %s69, %s83
    %p85 = scmp.eq.s32.totalorder %s26, 0
    %p86 = por %p84, %p85
    %s88 = sadd.s32 %s87, 1
    %p91 = scmp.eq.s32.totalorder %s20, 3
    %p92 = scmp.ne.s32.totalorder %s87, %s89
    %p93 = scmp.eq.s32.totalorder %s20, 0
    %p94 = por %p92, %p93
    %p95 = scmp.ne.s32.totalorder %s87, %s89
    %p96 = scmp.eq.s32.totalorder %s25, 3
    %p97 = por %p95, %p96
    %p98 = scmp.ne.s32.totalorder %s89, %s90
    %p99 = scmp.eq.s32.totalorder %s25, 0
    %p100 = por %p98, %p99
    %p101 = scmp.ne.s32.totalorder %s89, %s90
    %p102 = scmp.eq.s32.totalorder %s26, 3
    %p103 = por %p101, %p102
    %p105 = scmp.ne.s32.totalorder %s90, %s104
    %p106 = scmp.eq.s32.totalorder %s26, 0
    %p107 = por %p105, %p106
    %s109 = sadd.s32 %s108, 1
    %p112 = scmp.eq.s32.totalorder %s20, 3
    %p113 = scmp.ne.s32.totalorder %s108, %s110
    %p114 = scmp.eq.s32.totalorder %s20, 0
    %p115 = por %p113, %p114
    %p116 = scmp.ne.s32.totalorder %s108, %s110
    %p117 = scmp.eq.s32.totalorder %s25, 3
    %p118 = por %p116, %p117
    %p119 = scmp.ne.s32.totalorder %s110, %s111
    %p120 = scmp.eq.s32.totalorder %s25, 0
    %p121 = por %p119, %p120
    %p122 = scmp.ne.s32.totalorder %s110, %s111
    %p123 = scmp.eq.s32.totalorder %s26, 3
    %p124 = por %p122, %p123
    %p126 = scmp.ne.s32.totalorder %s111, %s125
    %p127 = scmp.eq.s32.totalorder %s26, 0
    %p128 = por %p126, %p127
    %s130 = sadd.s32 %s129, 1
    %p133 = scmp.eq.s32.totalorder %s20, 3
    %p134 = scmp.ne.s32.totalorder %s129, %s131
    %p135 = scmp.eq.s32.totalorder %s20, 0
    %p136 = por %p134, %p135
    %p137 = scmp.ne.s32.totalorder %s129, %s131
    %p138 = scmp.eq.s32.totalorder %s25, 3
    %p139 = por %p137, %p138
    %p140 = scmp.ne.s32.totalorder %s131, %s132
    %p141 = scmp.eq.s32.totalorder %s25, 0
    %p142 = por %p140, %p141
    %p143 = scmp.ne.s32.totalorder %s131, %s132
    %p144 = scmp.eq.s32.totalorder %s26, 3
    %p145 = por %p143, %p144
    %p147 = scmp.ne.s32.totalorder %s132, %s146
    %p148 = scmp.eq.s32.totalorder %s26, 0
    %p149 = por %p147, %p148
    %s151 = sadd.s32 %s150, 1
    %p154 = scmp.eq.s32.totalorder %s20, 3
    %p155 = scmp.ne.s32.totalorder %s150, %s152
    %p156 = scmp.eq.s32.totalorder %s20, 0
    %p157 = por %p155, %p156
    %p158 = scmp.ne.s32.totalorder %s150, %s152
    %p159 = scmp.eq.s32.totalorder %s25, 3
    %p160 = por %p158, %p159
    %p161 = scmp.ne.s32.totalorder %s152, %s153
    %p162 = scmp.eq.s32.totalorder %s25, 0
    %p163 = por %p161, %p162
    %p164 = scmp.ne.s32.totalorder %s152, %s153
    %p165 = scmp.eq.s32.totalorder %s26, 3
    %p166 = por %p164, %p165
    %p168 = scmp.ne.s32.totalorder %s153, %s167
    %p169 = scmp.eq.s32.totalorder %s26, 0
    %p170 = por %p168, %p169
    %s172 = sadd.s32 %s171, 1
    %p175 = scmp.eq.s32.totalorder %s20, 3
    %p176 = scmp.ne.s32.totalorder %s171, %s173
    %p177 = scmp.eq.s32.totalorder %s20, 0
    %p178 = por %p176, %p177
    %p179 = scmp.ne.s32.totalorder %s171, %s173
    %p180 = scmp.eq.s32.totalorder %s25, 3
    %p181 = por %p179, %p180
    %p182 = scmp.ne.s32.totalorder %s173, %s174
    %p183 = scmp.eq.s32.totalorder %s25, 0
    %p184 = por %p182, %p183
    %p185 = scmp.ne.s32.totalorder %s173, %s174
    %p186 = scmp.eq.s32.totalorder %s26, 3
    %p187 = por %p185, %p186
    %p189 = scmp.ne.s32.totalorder %s174, %s188
    %p190 = scmp.eq.s32.totalorder %s26, 0
    %p191 = por %p189, %p190
    %s192 = ssub.s32 %s28, %s35
    %p193 = scmp.eq.s32.totalorder %s192, 0
    %s195 = sadd.s32 %s194, 1
    %s196 = scalar_select %p193, %s194, %s195
    %p199 = pneg %p193
    %p200 = scmp.eq.s32.totalorder %s20, 3
    %p201 = por %p199, %p200
    %p202 = scmp.ne.s32.totalorder %s194, %s197
    %p203 = scmp.eq.s32.totalorder %s20, 0
    %p204 = por %p202, %p203
    %p205 = scmp.ne.s32.totalorder %s194, %s197
    %p206 = scmp.eq.s32.totalorder %s25, 3
    %p207 = por %p205, %p206
    %p208 = scmp.ne.s32.totalorder %s197, %s198
    %p209 = scmp.eq.s32.totalorder %s25, 0
    %p210 = por %p208, %p209
    %p211 = scmp.ne.s32.totalorder %s197, %s198
    %p212 = scmp.eq.s32.totalorder %s26, 3
    %p213 = por %p211, %p212
    %p215 = scmp.ne.s32.totalorder %s198, %s214
    %p216 = scmp.eq.s32.totalorder %s26, 0
    %p217 = por %p215, %p216
    %s218 = ssub.s32 %s28, %s35
    %p219 = scmp.eq.s32.totalorder %s218, 0
    %s221 = sadd.s32 %s220, 1
    %s222 = scalar_select %p219, %s220, %s221
    %p225 = pneg %p219
    %p226 = scmp.eq.s32.totalorder %s20, 3
    %p227 = por %p225, %p226
    %p228 = scmp.ne.s32.totalorder %s220, %s223
    %p229 = scmp.eq.s32.totalorder %s20, 0
    %p230 = por %p228, %p229
    %p231 = scmp.ne.s32.totalorder %s220, %s223
    %p232 = scmp.eq.s32.totalorder %s25, 3
    %p233 = por %p231, %p232
    %p234 = scmp.ne.s32.totalorder %s223, %s224
    %p235 = scmp.eq.s32.totalorder %s25, 0
    %p236 = por %p234, %p235
    %p237 = scmp.ne.s32.totalorder %s223, %s224
    %p238 = scmp.eq.s32.totalorder %s26, 3
    %p239 = por %p237, %p238
    %p241 = scmp.ne.s32.totalorder %s224, %s240
    %p242 = scmp.eq.s32.totalorder %s26, 0
    %p243 = por %p241, %p242
    %s244 = ssub.s32 %s28, %s35
    %p245 = scmp.eq.s32.totalorder %s244, 0
    %s247 = sadd.s32 %s246, 1
    %s248 = scalar_select %p245, %s246, %s247
    %p251 = pneg %p245
    %p252 = scmp.eq.s32.totalorder %s20, 3
    %p253 = por %p251, %p252
    %p254 = scmp.ne.s32.totalorder %s246, %s249
    %p255 = scmp.eq.s32.totalorder %s20, 0
    %p256 = por %p254, %p255
    %p257 = scmp.ne.s32.totalorder %s246, %s249
    %p258 = scmp.eq.s32.totalorder %s25, 3
    %p259 = por %p257, %p258
    %p260 = scmp.ne.s32.totalorder %s249, %s250
    %p261 = scmp.eq.s32.totalorder %s25, 0
    %p262 = por %p260, %p261
    %p263 = scmp.ne.s32.totalorder %s249, %s250
    %p264 = scmp.eq.s32.totalorder %s26, 3
    %p265 = por %p263, %p264
    %p267 = scmp.ne.s32.totalorder %s250, %s266
    %p268 = scmp.eq.s32.totalorder %s26, 0
    %p269 = por %p267, %p268
    %s270 = ssub.s32 %s28, %s35
    %p271 = scmp.eq.s32.totalorder %s270, 0
    %s273 = sadd.s32 %s272, 1
    %s274 = scalar_select %p271, %s272, %s273
    %p277 = pneg %p271
    %p278 = scmp.eq.s32.totalorder %s20, 3
    %p279 = por %p277, %p278
    %p280 = scmp.ne.s32.totalorder %s272, %s275
    %p281 = scmp.eq.s32.totalorder %s20, 0
    %p282 = por %p280, %p281
    %p283 = scmp.ne.s32.totalorder %s272, %s275
    %p284 = scmp.eq.s32.totalorder %s25, 3
    %p285 = por %p283, %p284
    %p286 = scmp.ne.s32.totalorder %s275, %s276
    %p287 = scmp.eq.s32.totalorder %s25, 0
    %p288 = por %p286, %p287
    %p289 = scmp.ne.s32.totalorder %s275, %s276
    %p290 = scmp.eq.s32.totalorder %s26, 3
    %p291 = por %p289, %p290
    %p293 = scmp.ne.s32.totalorder %s276, %s292
    %p294 = scmp.eq.s32.totalorder %s26, 0
    %p295 = por %p293, %p294
    %s296 = ssub.s32 %s27, %s39
    %p297 = scmp.eq.s32.totalorder %s296, 0
    %s299 = sadd.s32 %s298, 1
    %s300 = scalar_select %p297, %s298, %s299
    %p303 = pneg %p297
    %p304 = scmp.eq.s32.totalorder %s20, 3
    %p305 = por %p303, %p304
    %p306 = scmp.ne.s32.totalorder %s298, %s301
    %p307 = scmp.eq.s32.totalorder %s20, 0
    %p308 = por %p306, %p307
    %p309 = scmp.ne.s32.totalorder %s298, %s301
    %p310 = scmp.eq.s32.totalorder %s25, 3
    %p311 = por %p309, %p310
    %p312 = scmp.ne.s32.totalorder %s301, %s302
    %p313 = scmp.eq.s32.totalorder %s25, 0
    %p314 = por %p312, %p313
    %p315 = scmp.ne.s32.totalorder %s301, %s302
    %p316 = scmp.eq.s32.totalorder %s26, 3
    %p317 = por %p315, %p316
    %p319 = scmp.ne.s32.totalorder %s302, %s318
    %p320 = scmp.eq.s32.totalorder %s26, 0
    %p321 = por %p319, %p320
    %s322 = ssub.s32 %s27, %s39
    %p323 = scmp.eq.s32.totalorder %s322, 0
    %s325 = sadd.s32 %s324, 1
    %s326 = scalar_select %p323, %s324, %s325
    %p329 = pneg %p323
    %p330 = scmp.eq.s32.totalorder %s20, 3
    %p331 = por %p329, %p330
    %p332 = scmp.ne.s32.totalorder %s324, %s327
    %p333 = scmp.eq.s32.totalorder %s20, 0
    %p334 = por %p332, %p333
    %p335 = scmp.ne.s32.totalorder %s324, %s327
    %p336 = scmp.eq.s32.totalorder %s25, 3
    %p337 = por %p335, %p336
    %p338 = scmp.ne.s32.totalorder %s327, %s328
    %p339 = scmp.eq.s32.totalorder %s25, 0
    %p340 = por %p338, %p339
    %p341 = scmp.ne.s32.totalorder %s327, %s328
    %p342 = scmp.eq.s32.totalorder %s26, 3
    %p343 = por %p341, %p342
    %p345 = scmp.ne.s32.totalorder %s328, %s344
    %p346 = scmp.eq.s32.totalorder %s26, 0
    %p347 = por %p345, %p346
    %s348 = ssub.s32 %s27, %s39
    %p349 = scmp.eq.s32.totalorder %s348, 0
    %s351 = sadd.s32 %s350, 1
    %s352 = scalar_select %p349, %s350, %s351
    %p355 = pneg %p349
    %p356 = scmp.eq.s32.totalorder %s20, 3
    %p357 = por %p355, %p356
    %p358 = scmp.ne.s32.totalorder %s350, %s353
    %p359 = scmp.eq.s32.totalorder %s20, 0
    %p360 = por %p358, %p359
    %p361 = scmp.ne.s32.totalorder %s350, %s353
    %p362 = scmp.eq.s32.totalorder %s25, 3
    %p363 = por %p361, %p362
    %p364 = scmp.ne.s32.totalorder %s353, %s354
    %p365 = scmp.eq.s32.totalorder %s25, 0
    %p366 = por %p364, %p365
    %p367 = scmp.ne.s32.totalorder %s353, %s354
    %p368 = scmp.eq.s32.totalorder %s26, 3
    %p369 = por %p367, %p368
    %p371 = scmp.ne.s32.totalorder %s354, %s370
    %p372 = scmp.eq.s32.totalorder %s26, 0
    %p373 = por %p371, %p372
    %p374 = scmp.le.s32.totalorder 1, %s20
    %p375 = scmp.lt.s32.totalorder %s20, 5
    %p376 = pnand %p374, %p375
    %p377 = pneg %p376
    // Predicated region
    $region9: #{vit_forward.1} parent=5 // pred_check
      _
    $region10: #{vit_forward.1} parent=5 // pred_check_branch
      %379 = sbr.rel (%p376) target = $region12
    $region11: #{vit_forward.1} parent=5 // pred_region
      %s380 = ssub.s32 %s20, 1
      // Predicated region
      $region13: #{vit_forward.1} parent=11 // pred_check
        %p381 = pneg %p79
      $region14: #{vit_forward.1} parent=11 // pred_check_branch
        %383 = sbr.rel (%p381) target = $region16
      $region15: #{vit_forward.1} parent=11 // pred_region
        _
      $region16: #{vit_forward.1} parent=11 // pred_fallthru
        _
      // Predicated region
      $region17: #{vit_forward.1} parent=11 // pred_check
        %p384 = pneg %p100
      $region18: #{vit_forward.1} parent=11 // pred_check_branch
        %386 = sbr.rel (%p384) target = $region20
      $region19: #{vit_forward.1} parent=11 // pred_region
        _
      $region20: #{vit_forward.1} parent=11 // pred_fallthru
        _
      // Predicated region
      $region21: #{vit_forward.1} parent=11 // pred_check
        %p387 = pneg %p121
      $region22: #{vit_forward.1} parent=11 // pred_check_branch
        %389 = sbr.rel (%p387) target = $region24
      $region23: #{vit_forward.1} parent=11 // pred_region
        _
      $region24: #{vit_forward.1} parent=11 // pred_fallthru
        _
      // Predicated region
      $region25: #{vit_forward.1} parent=11 // pred_check
        %p390 = pneg %p142
      $region26: #{vit_forward.1} parent=11 // pred_check_branch
        %392 = sbr.rel (%p390) target = $region28
      $region27: #{vit_forward.1} parent=11 // pred_region
        _
      $region28: #{vit_forward.1} parent=11 // pred_fallthru
        _
      // Predicated region
      $region29: #{vit_forward.1} parent=11 // pred_check
        %p393 = pneg %p163
      $region30: #{vit_forward.1} parent=11 // pred_check_branch
        %395 = sbr.rel (%p393) target = $region32
      $region31: #{vit_forward.1} parent=11 // pred_region
        _
      $region32: #{vit_forward.1} parent=11 // pred_fallthru
        _
      // Predicated region
      $region33: #{vit_forward.1} parent=11 // pred_check
        %p396 = pneg %p184
      $region34: #{vit_forward.1} parent=11 // pred_check_branch
        %398 = sbr.rel (%p396) target = $region36
      $region35: #{vit_forward.1} parent=11 // pred_region
        _
      $region36: #{vit_forward.1} parent=11 // pred_fallthru
        _
    $region12: #{vit_forward.1} parent=5 // pred_fallthru
      _
    %p399 = scmp.lt.s32.totalorder %s20, 4
    // Predicated region
    $region37: #{vit_forward.1} parent=5 // pred_check
      %p400 = pneg %p399
    $region38: #{vit_forward.1} parent=5 // pred_check_branch
      %402 = sbr.rel (%p400) target = $region40
    $region39: #{vit_forward.1} parent=5 // pred_region
      // Predicated region
      $region41: #{vit_forward.1} parent=39 // pred_check
        %p403 = pneg %p52
      $region42: #{vit_forward.1} parent=39 // pred_check_branch
        %405 = sbr.rel (%p403) target = $region44
      $region43: #{vit_forward.1} parent=39 // pred_region
        %p406 = scmp.lt.s32.totalorder %s27, 1
        %s407 = scalar_select %p406, %s27, 1
        %s408 = smul.addr %s407, 6
        %s409 = smul.addr %s408, 4
        %s410 = scalar_lea.vmem %s0, %s409
      $region44: #{vit_forward.1} parent=39 // pred_fallthru
        _
      // Predicated region
      $region45: #{vit_forward.1} parent=39 // pred_check
        %p411 = pneg %p204
      $region46: #{vit_forward.1} parent=39 // pred_check_branch
        %413 = sbr.rel (%p411) target = $region48
      $region47: #{vit_forward.1} parent=39 // pred_region
        %p414 = scmp.lt.s32.totalorder %s28, 1
        %s415 = scalar_select %p414, %s28, 1
        %s416 = smul.addr %s415, 18
        %s417 = smul.addr %s416, 4
        %s418 = scalar_lea.vmem %s7, %s417
      $region48: #{vit_forward.1} parent=39 // pred_fallthru
        _
      // Predicated region
      $region49: #{vit_forward.1} parent=39 // pred_check
        %p419 = pneg %p230
      $region50: #{vit_forward.1} parent=39 // pred_check_branch
        %421 = sbr.rel (%p419) target = $region52
      $region51: #{vit_forward.1} parent=39 // pred_region
        %p422 = scmp.lt.s32.totalorder %s28, 1
        %s423 = scalar_select %p422, %s28, 1
        %s424 = smul.addr %s423, 24
        %s425 = smul.addr %s424, 4
        %s426 = scalar_lea.vmem %s8, %s425
      $region52: #{vit_forward.1} parent=39 // pred_fallthru
        _
      // Predicated region
      $region53: #{vit_forward.1} parent=39 // pred_check
        %p427 = pneg %p256
      $region54: #{vit_forward.1} parent=39 // pred_check_branch
        %429 = sbr.rel (%p427) target = $region56
      $region55: #{vit_forward.1} parent=39 // pred_region
        %p430 = scmp.lt.s32.totalorder %s28, 1
        %s431 = scalar_select %p430, %s28, 1
        %s432 = smul.addr %s431, 2
        %s433 = smul.addr %s432, 8
        %s434 = scalar_lea.vmem %s9, %s433
      $region56: #{vit_forward.1} parent=39 // pred_fallthru
        _
      // Predicated region
      $region57: #{vit_forward.1} parent=39 // pred_check
        %p435 = pneg %p282
      $region58: #{vit_forward.1} parent=39 // pred_check_branch
        %437 = sbr.rel (%p435) target = $region60
      $region59: #{vit_forward.1} parent=39 // pred_region
        %p438 = scmp.lt.s32.totalorder %s28, 1
        %s439 = scalar_select %p438, %s28, 1
        %s440 = smul.addr %s439, 2
        %s441 = scalar_lea.vmem %s10, %s440
      $region60: #{vit_forward.1} parent=39 // pred_fallthru
        _
    $region40: #{vit_forward.1} parent=5 // pred_fallthru
      _
    %p442 = scmp.le.s32.totalorder 1, %s20
    %p443 = scmp.lt.s32.totalorder %s20, 5
    %p444 = pnand %p442, %p443
    %p445 = pneg %p444
    // Predicated region
    $region61: #{vit_forward.1} parent=5 // pred_check
      _
    $region62: #{vit_forward.1} parent=5 // pred_check_branch
      %447 = sbr.rel (%p444) target = $region64
    $region63: #{vit_forward.1} parent=5 // pred_region
      %s448 = ssub.s32 %s20, 1
      %p449 = scmp.lt.s32.totalorder %s29, 1
      %s450 = scalar_select %p449, %s29, 1
      %s451 = smul.addr %s450, 6
      %s452 = smul.addr %s451, 4
      %s453 = scalar_lea.vmem %s0, %s452
      %p454 = pneg %p58
      %p455 = pneg %p55
      %p456 = pneg %p79
      %p457 = pneg %p76
      %p458 = pneg %p100
      %p459 = pneg %p97
      %p460 = pneg %p121
      %p461 = pneg %p118
      %p462 = pneg %p142
      %p463 = pneg %p139
      %p464 = pneg %p163
      %p465 = pneg %p160
      %p466 = pneg %p184
      %p467 = pneg %p181
      %p468 = scmp.lt.s32.totalorder %s30, 1
      %s469 = scalar_select %p468, %s30, 1
      %s470 = smul.addr %s469, 18
      %s471 = smul.addr %s470, 4
      %s472 = scalar_lea.vmem %s7, %s471
      %p473 = pneg %p210
      %p474 = pneg %p207
      %p475 = scmp.lt.s32.totalorder %s30, 1
      %s476 = scalar_select %p475, %s30, 1
      %s477 = smul.addr %s476, 24
      %s478 = smul.addr %s477, 4
      %s479 = scalar_lea.vmem %s8, %s478
      %p480 = pneg %p236
      %p481 = pneg %p233
      %p482 = scmp.lt.s32.totalorder %s30, 1
      %s483 = scalar_select %p482, %s30, 1
      %s484 = smul.addr %s483, 2
      %s485 = smul.addr %s484, 8
      %s486 = scalar_lea.vmem %s9, %s485
      %p487 = pneg %p262
      %p488 = pneg %p259
      %p489 = scmp.lt.s32.totalorder %s30, 1
      %s490 = scalar_select %p489, %s30, 1
      %s491 = smul.addr %s490, 2
      %s492 = scalar_lea.vmem %s10, %s491
      %p493 = pneg %p288
      %p494 = pneg %p285
      %p495 = pneg %p314
      %p496 = pneg %p311
      %p497 = scmp.lt.s32.totalorder %s29, 1
      %s498 = scalar_select %p497, %s29, 1
      %s499 = smul.addr %s498, 8
      %s500 = scalar_lea.vmem %s11, %s499
      %p501 = pneg %p340
      %p502 = pneg %p337
      %p503 = scmp.lt.s32.totalorder %s29, 1
      %s504 = scalar_select %p503, %s29, 1
      %s505 = smul.addr %s504, 8
      %s506 = scalar_lea.vmem %s12, %s505
      %p507 = pneg %p366
      %p508 = pneg %p363
      %p509 = scmp.lt.s32.totalorder %s29, 1
      %s510 = scalar_select %p509, %s29, 1
      %s511 = smul.addr %s510, 8
      %s512 = scalar_lea.vmem %s13, %s511
      %p513 = scmp.lt.s32.totalorder %s29, 1
      %s514 = scalar_select %p513, %s29, 1
      %s515 = smul.addr %s514, 6
      %s516 = smul.addr %s515, 4
      %s517 = scalar_lea.vmem %s0, %s516
      %p518 = scmp.lt.s32.totalorder %s30, 1
      %s519 = scalar_select %p518, %s30, 1
      %s520 = smul.addr %s519, 18
      %s521 = smul.addr %s520, 4
      %s522 = scalar_lea.vmem %s7, %s521
      %p523 = scmp.lt.s32.totalorder %s30, 1
      %s524 = scalar_select %p523, %s30, 1
      %s525 = smul.addr %s524, 24
      %s526 = smul.addr %s525, 4
      %s527 = scalar_lea.vmem %s8, %s526
      %p528 = scmp.lt.s32.totalorder %s30, 1
      %s529 = scalar_select %p528, %s30, 1
      %s530 = smul.addr %s529, 2
      %s531 = smul.addr %s530, 8
      %s532 = scalar_lea.vmem %s9, %s531
      %p533 = scmp.lt.s32.totalorder %s30, 1
      %s534 = scalar_select %p533, %s30, 1
      %s535 = smul.addr %s534, 2
      %s536 = scalar_lea.vmem %s10, %s535
      %p537 = scmp.lt.s32.totalorder %s29, 1
      %s538 = scalar_select %p537, %s29, 1
      %s539 = smul.addr %s538, 8
      %s540 = scalar_lea.vmem %s11, %s539
      %p541 = scmp.lt.s32.totalorder %s29, 1
      %s542 = scalar_select %p541, %s29, 1
      %s543 = smul.addr %s542, 8
      %s544 = scalar_lea.vmem %s12, %s543
      %p545 = scmp.lt.s32.totalorder %s29, 1
      %s546 = scalar_select %p545, %s29, 1
      %s547 = smul.addr %s546, 8
      %s548 = scalar_lea.vmem %s13, %s547
      %p550 = scmp.eq.s32.totalorder %s30, 0
      // Predicated region
      $region65: #{vit_forward.1} parent=63 // pred_check
        %p551 = pneg %p550
      $region66: #{vit_forward.1} parent=63 // pred_check_branch
        %553 = sbr.rel (%p551) target = $region68
      $region67: #{vit_forward.1} parent=63 // pred_region
        %v554 = vld [vmem:[%s517] sm:$0xff]
        %v555 = vld [vmem:[%s517 + $0x8] sm:$0xff]
        %v556 = vld [vmem:[%s517 + $0x10] sm:$0xff]
        %v557 = vld [vmem:[%s1] sm:$0xf]
        %v558 = vld [vmem:[%s1 + $0x4] sm:$0xf]
        %v559 = vld [vmem:[%s1 + $0x8] sm:$0xf]
        %v560 = vld [vmem:[%s1 + $0xc] sm:$0xf]
        %v561 = vld [vmem:[%s1 + $0x10] sm:$0xf]
        %v562 = vld [vmem:[%s1 + $0x14] sm:$0xf]
        %v563 = vld [vmem:[%s1 + $0x18] sm:$0xf]
        %v564 = vld [vmem:[%s1 + $0x1c] sm:$0xf]
        %v565 = vld [vmem:[%s1 + $0x20] sm:$0xf]
        %v566 = vld [vmem:[%s1 + $0x24] sm:$0xf]
        %v567 = vld [vmem:[%s1 + $0x28] sm:$0xf]
        %v568 = vld [vmem:[%s1 + $0x2c] sm:$0xf]
        %v569 = vld [vmem:[%s1 + $0x30] sm:$0xf]
        %v570 = vld [vmem:[%s1 + $0x34] sm:$0xf]
        %v571 = vld [vmem:[%s1 + $0x38] sm:$0xf]
        %v572 = vld [vmem:[%s1 + $0x3c] sm:$0xf]
        %v573 = vld [vmem:[%s1 + $0x40] sm:$0xf]
        %v574 = vld [vmem:[%s1 + $0x44] sm:$0xf]
        %v575 = vld [vmem:[%s1 + $0x48] sm:$0xf]
        %v576 = vld [vmem:[%s1 + $0x4c] sm:$0xf]
        %v577 = vld [vmem:[%s1 + $0x50] sm:$0xf]
        %v578 = vld [vmem:[%s1 + $0x54] sm:$0xf]
        %v579 = vld [vmem:[%s1 + $0x58] sm:$0xf]
        %v580 = vld [vmem:[%s1 + $0x5c] sm:$0xf]
        %v581 = vld [vmem:[%s1 + $0x60] sm:$0xf]
        %v582 = vld [vmem:[%s1 + $0x64] sm:$0xf]
        %v583 = vld [vmem:[%s1 + $0x68] sm:$0xf]
        %v584 = vld [vmem:[%s1 + $0x6c] sm:$0xf]
        %v585 = vld [vmem:[%s1 + $0x70] sm:$0xf]
        %v586 = vld [vmem:[%s1 + $0x74] sm:$0xf]
        %v587 = vld [vmem:[%s1 + $0x78] sm:$0xf]
        %v588 = vld [vmem:[%s1 + $0x7c] sm:$0xf]
        %v589 = vld [vmem:[%s1 + $0x80] sm:$0xf]
        %v590 = vld [vmem:[%s1 + $0x84] sm:$0xf]
        %v591 = vld [vmem:[%s1 + $0x88] sm:$0xf]
        %v592 = vld [vmem:[%s1 + $0x8c] sm:$0xf]
        %v593 = vld [vmem:[%s1 + $0x90] sm:$0xf]
        %v594 = vld [vmem:[%s1 + $0x94] sm:$0xf]
        %v595 = vld [vmem:[%s1 + $0x98] sm:$0xf]
        %v596 = vld [vmem:[%s1 + $0x9c] sm:$0xf]
        %v597 = vld [vmem:[%s1 + $0xa0] sm:$0xf]
        %v598 = vld [vmem:[%s1 + $0xa4] sm:$0xf]
        %v599 = vld [vmem:[%s1 + $0xa8] sm:$0xf]
        %v600 = vld [vmem:[%s1 + $0xac] sm:$0xf]
        %v601 = vld [vmem:[%s1 + $0xb0] sm:$0xf]
        %v602 = vld [vmem:[%s1 + $0xb4] sm:$0xf]
        %v603 = vld [vmem:[%s1 + $0xb8] sm:$0xf]
        %v604 = vld [vmem:[%s1 + $0xbc] sm:$0xf]
        %v605 = vld [vmem:[%s1 + $0xc0] sm:$0xf]
        %v606 = vld [vmem:[%s1 + $0xc4] sm:$0xf]
        %v607 = vld [vmem:[%s1 + $0xc8] sm:$0xf]
        %v608 = vld [vmem:[%s1 + $0xcc] sm:$0xf]
        %v609 = vld [vmem:[%s1 + $0xd0] sm:$0xf]
        %v610 = vld [vmem:[%s1 + $0xd4] sm:$0xf]
        %v611 = vld [vmem:[%s1 + $0xd8] sm:$0xf]
        %v612 = vld [vmem:[%s1 + $0xdc] sm:$0xf]
        %v613 = vld [vmem:[%s1 + $0xe0] sm:$0xf]
        %v614 = vld [vmem:[%s1 + $0xe4] sm:$0xf]
        %v615 = vld [vmem:[%s1 + $0xe8] sm:$0xf]
        %v616 = vld [vmem:[%s1 + $0xec] sm:$0xf]
        %v617 = vld [vmem:[%s1 + $0xf0] sm:$0xf]
        %v618 = vld [vmem:[%s1 + $0xf4] sm:$0xf]
        %v619 = vld [vmem:[%s1 + $0xf8] sm:$0xf]
        %v620 = vld [vmem:[%s1 + $0xfc] sm:$0xf]
        %v621 = vld [vmem:[%s1 + $0x100] sm:$0xf]
        %v622 = vld [vmem:[%s1 + $0x104] sm:$0xf]
        %v623 = vld [vmem:[%s1 + $0x108] sm:$0xf]
        %v624 = vld [vmem:[%s1 + $0x10c] sm:$0xf]
        %v625 = vld [vmem:[%s1 + $0x110] sm:$0xf]
        %v626 = vld [vmem:[%s1 + $0x114] sm:$0xf]
        %v627 = vld [vmem:[%s1 + $0x118] sm:$0xf]
        %v628 = vld [vmem:[%s1 + $0x11c] sm:$0xf]
        %v629 = vld [vmem:[%s1 + $0x120] sm:$0xf]
        %v630 = vld [vmem:[%s1 + $0x124] sm:$0xf]
        %v631 = vld [vmem:[%s1 + $0x128] sm:$0xf]
        %v632 = vld [vmem:[%s1 + $0x12c] sm:$0xf]
        %v633 = vld [vmem:[%s1 + $0x130] sm:$0xf]
        %v634 = vld [vmem:[%s1 + $0x134] sm:$0xf]
        %v635 = vld [vmem:[%s1 + $0x138] sm:$0xf]
        %v636 = vld [vmem:[%s1 + $0x13c] sm:$0xf]
        %v637 = vld [vmem:[%s1 + $0x140] sm:$0xf]
        %v638 = vld [vmem:[%s1 + $0x144] sm:$0xf]
        %v639 = vld [vmem:[%s1 + $0x148] sm:$0xf]
        %v640 = vld [vmem:[%s1 + $0x14c] sm:$0xf]
        %v641 = vld [vmem:[%s1 + $0x150] sm:$0xf]
        %v642 = vld [vmem:[%s1 + $0x154] sm:$0xf]
        %v643 = vld [vmem:[%s1 + $0x158] sm:$0xf]
        %v644 = vld [vmem:[%s1 + $0x15c] sm:$0xf]
        %v645 = vld [vmem:[%s1 + $0x160] sm:$0xf]
        %v646 = vld [vmem:[%s1 + $0x164] sm:$0xf]
        %v647 = vld [vmem:[%s1 + $0x168] sm:$0xf]
        %v648 = vld [vmem:[%s1 + $0x16c] sm:$0xf]
        %v649 = vld [vmem:[%s1 + $0x170] sm:$0xf]
        %v650 = vld [vmem:[%s1 + $0x174] sm:$0xf]
        %v651 = vld [vmem:[%s1 + $0x178] sm:$0xf]
        %v652 = vld [vmem:[%s1 + $0x17c] sm:$0xf]
        %v653 = vld [vmem:[%s2] sm:$0xff]
        %v657 = vunpack.c.l.b16 %v554
        %v658 = vunpack.c.h.b16 %v554
        %v659 = vunpack.c.l.b16 %v555
        %v660 = vunpack.c.h.b16 %v555
        %v661 = vunpack.c.l.b16 %v556
        %v662 = vunpack.c.h.b16 %v556
        %v663 = vpack.c.b16 %v657, %v657
        %v664 = vpack.c.b16 %v658, %v658
        %v665 = vpack.c.b16 %v659, %v659
        %v666 = vpack.c.b16 %v660, %v660
        %v667 = vpack.c.b16 %v661, %v661
        %v668 = vpack.c.b16 %v662, %v662
        %v771 = vunpack.c.l.b16 %v557
        %v772 = vunpack.c.l.b16 %v558
        %v773 = vunpack.c.l.b16 %v559
        %v774 = vunpack.c.l.b16 %v560
        %v775 = vunpack.c.l.b16 %v561
        %v776 = vunpack.c.l.b16 %v562
        %v777 = vunpack.c.l.b16 %v563
        %v778 = vunpack.c.l.b16 %v564
        %v779 = vunpack.c.l.b16 %v565
        %v780 = vunpack.c.l.b16 %v566
        %v781 = vunpack.c.l.b16 %v567
        %v782 = vunpack.c.l.b16 %v568
        %v783 = vunpack.c.l.b16 %v569
        %v784 = vunpack.c.l.b16 %v570
        %v785 = vunpack.c.l.b16 %v571
        %v786 = vunpack.c.l.b16 %v572
        %v787 = vunpack.c.l.b16 %v573
        %v788 = vunpack.c.l.b16 %v574
        %v789 = vunpack.c.l.b16 %v575
        %v790 = vunpack.c.l.b16 %v576
        %v791 = vunpack.c.l.b16 %v577
        %v792 = vunpack.c.l.b16 %v578
        %v793 = vunpack.c.l.b16 %v579
        %v794 = vunpack.c.l.b16 %v580
        %v795 = vunpack.c.l.b16 %v581
        %v796 = vunpack.c.l.b16 %v582
        %v797 = vunpack.c.l.b16 %v583
        %v798 = vunpack.c.l.b16 %v584
        %v799 = vunpack.c.l.b16 %v585
        %v800 = vunpack.c.l.b16 %v586
        %v801 = vunpack.c.l.b16 %v587
        %v802 = vunpack.c.l.b16 %v588
        %v803 = vunpack.c.l.b16 %v589
        %v804 = vunpack.c.l.b16 %v590
        %v805 = vunpack.c.l.b16 %v591
        %v806 = vunpack.c.l.b16 %v592
        %v807 = vunpack.c.l.b16 %v593
        %v808 = vunpack.c.l.b16 %v594
        %v809 = vunpack.c.l.b16 %v595
        %v810 = vunpack.c.l.b16 %v596
        %v811 = vunpack.c.l.b16 %v597
        %v812 = vunpack.c.l.b16 %v598
        %v813 = vunpack.c.l.b16 %v599
        %v814 = vunpack.c.l.b16 %v600
        %v815 = vunpack.c.l.b16 %v601
        %v816 = vunpack.c.l.b16 %v602
        %v817 = vunpack.c.l.b16 %v603
        %v818 = vunpack.c.l.b16 %v604
        %v819 = vunpack.c.l.b16 %v605
        %v820 = vunpack.c.l.b16 %v606
        %v821 = vunpack.c.l.b16 %v607
        %v822 = vunpack.c.l.b16 %v608
        %v823 = vunpack.c.l.b16 %v609
        %v824 = vunpack.c.l.b16 %v610
        %v825 = vunpack.c.l.b16 %v611
        %v826 = vunpack.c.l.b16 %v612
        %v827 = vunpack.c.l.b16 %v613
        %v828 = vunpack.c.l.b16 %v614
        %v829 = vunpack.c.l.b16 %v615
        %v830 = vunpack.c.l.b16 %v616
        %v831 = vunpack.c.l.b16 %v617
        %v832 = vunpack.c.l.b16 %v618
        %v833 = vunpack.c.l.b16 %v619
        %v834 = vunpack.c.l.b16 %v620
        %v835 = vunpack.c.l.b16 %v621
        %v836 = vunpack.c.l.b16 %v622
        %v837 = vunpack.c.l.b16 %v623
        %v838 = vunpack.c.l.b16 %v624
        %v839 = vunpack.c.l.b16 %v625
        %v840 = vunpack.c.l.b16 %v626
        %v841 = vunpack.c.l.b16 %v627
        %v842 = vunpack.c.l.b16 %v628
        %v843 = vunpack.c.l.b16 %v629
        %v844 = vunpack.c.l.b16 %v630
        %v845 = vunpack.c.l.b16 %v631
        %v846 = vunpack.c.l.b16 %v632
        %v847 = vunpack.c.l.b16 %v633
        %v848 = vunpack.c.l.b16 %v634
        %v849 = vunpack.c.l.b16 %v635
        %v850 = vunpack.c.l.b16 %v636
        %v851 = vunpack.c.l.b16 %v637
        %v852 = vunpack.c.l.b16 %v638
        %v853 = vunpack.c.l.b16 %v639
        %v854 = vunpack.c.l.b16 %v640
        %v855 = vunpack.c.l.b16 %v641
        %v856 = vunpack.c.l.b16 %v642
        %v857 = vunpack.c.l.b16 %v643
        %v858 = vunpack.c.l.b16 %v644
        %v859 = vunpack.c.l.b16 %v645
        %v860 = vunpack.c.l.b16 %v646
        %v861 = vunpack.c.l.b16 %v647
        %v862 = vunpack.c.l.b16 %v648
        %v863 = vunpack.c.l.b16 %v649
        %v864 = vunpack.c.l.b16 %v650
        %v865 = vunpack.c.l.b16 %v651
        %v866 = vunpack.c.l.b16 %v652
        %v867 = vpack.c.b16 %v772, %v771
        %v868 = vpack.c.b16 %v774, %v773
        %v869 = vpack.c.b16 %v776, %v775
        %v870 = vpack.c.b16 %v778, %v777
        %v871 = vpack.c.b16 %v780, %v779
        %v872 = vpack.c.b16 %v782, %v781
        %v873 = vpack.c.b16 %v784, %v783
        %v874 = vpack.c.b16 %v786, %v785
        %v875 = vpack.c.b16 %v788, %v787
        %v876 = vpack.c.b16 %v790, %v789
        %v877 = vpack.c.b16 %v792, %v791
        %v878 = vpack.c.b16 %v794, %v793
        %v879 = vpack.c.b16 %v796, %v795
        %v880 = vpack.c.b16 %v798, %v797
        %v881 = vpack.c.b16 %v800, %v799
        %v882 = vpack.c.b16 %v802, %v801
        %v883 = vpack.c.b16 %v804, %v803
        %v884 = vpack.c.b16 %v806, %v805
        %v885 = vpack.c.b16 %v808, %v807
        %v886 = vpack.c.b16 %v810, %v809
        %v887 = vpack.c.b16 %v812, %v811
        %v888 = vpack.c.b16 %v814, %v813
        %v889 = vpack.c.b16 %v816, %v815
        %v890 = vpack.c.b16 %v818, %v817
        %v891 = vpack.c.b16 %v820, %v819
        %v892 = vpack.c.b16 %v822, %v821
        %v893 = vpack.c.b16 %v824, %v823
        %v894 = vpack.c.b16 %v826, %v825
        %v895 = vpack.c.b16 %v828, %v827
        %v896 = vpack.c.b16 %v830, %v829
        %v897 = vpack.c.b16 %v832, %v831
        %v898 = vpack.c.b16 %v834, %v833
        %v899 = vpack.c.b16 %v836, %v835
        %v900 = vpack.c.b16 %v838, %v837
        %v901 = vpack.c.b16 %v840, %v839
        %v902 = vpack.c.b16 %v842, %v841
        %v903 = vpack.c.b16 %v844, %v843
        %v904 = vpack.c.b16 %v846, %v845
        %v905 = vpack.c.b16 %v848, %v847
        %v906 = vpack.c.b16 %v850, %v849
        %v907 = vpack.c.b16 %v852, %v851
        %v908 = vpack.c.b16 %v854, %v853
        %v909 = vpack.c.b16 %v856, %v855
        %v910 = vpack.c.b16 %v858, %v857
        %v911 = vpack.c.b16 %v860, %v859
        %v912 = vpack.c.b16 %v862, %v861
        %v913 = vpack.c.b16 %v864, %v863
        %v914 = vpack.c.b16 %v866, %v865
        %963 = vmatprep.subr.bf16.mxu0 0
        %964 = vmatpush1.bf16.msra.mxu0 %v874
        %965 = vmatprep.subr.bf16.mxu0 0
        %966 = vmatpush1.bf16.msra.mxu0 %v873
        %967 = vmatprep.subr.bf16.mxu0 0
        %968 = vmatpush1.bf16.msra.mxu0 %v872
        %969 = vmatprep.subr.bf16.mxu0 0
        %970 = vmatpush1.bf16.msra.mxu0 %v871
        %971 = vmatprep.subr.bf16.mxu0 0
        %972 = vmatpush1.bf16.msra.mxu0 %v870
        %973 = vmatprep.subr.bf16.mxu0 0
        %974 = vmatpush1.bf16.msra.mxu0 %v869
        %975 = vmatprep.subr.bf16.mxu0 0
        %976 = vmatpush1.bf16.msra.mxu0 %v868
        %977 = vmatprep.subr.bf16.mxu0 0
        %978 = vmatpush1.bf16.msra.mxu0 %v867
        %979 = vmatprep.subr.bf16.mxu0 0
        %980 = vmatpush2.bf16.msra.mxu0 %v882
        %981 = vmatprep.subr.bf16.mxu0 0
        %982 = vmatpush2.bf16.msra.mxu0 %v881
        %983 = vmatprep.subr.bf16.mxu0 0
        %984 = vmatpush2.bf16.msra.mxu0 %v880
        %985 = vmatprep.subr.bf16.mxu0 0
        %986 = vmatpush2.bf16.msra.mxu0 %v879
        %987 = vmatprep.subr.bf16.mxu0 0
        %988 = vmatpush2.bf16.msra.mxu0 %v878
        %989 = vmatprep.subr.bf16.mxu0 0
        %990 = vmatpush2.bf16.msra.mxu0 %v877
        %991 = vmatprep.subr.bf16.mxu0 0
        %992 = vmatpush2.bf16.msra.mxu0 %v876
        %993 = vmatprep.subr.bf16.mxu0 0
        %994 = vmatpush2.bf16.msra.mxu0 %v875
        %995 = vmatprep.mubr.bf16.mxu0 %v664
        %996 = vmatmul.mubr.bf16.gmra.mxu0 %v663
        %v997 = vpop.f32.mrf.mxu0
        %v998 = vadd.f32 %v653, %v997
        %v999 = vpop.f32.mrf.mxu0
        %v1000 = vpop.f32.mrf.mxu0
        %v1001 = vpop.f32.mrf.mxu0
        %1002 = vdwg.mxu0
        %1003 = vmatprep.subr.bf16.mxu0 0
        %1004 = vmatpush1.bf16.msra.mxu0 %v890
        %1005 = vmatprep.subr.bf16.mxu0 0
        %1006 = vmatpush1.bf16.msra.mxu0 %v889
        %1007 = vmatprep.subr.bf16.mxu0 0
        %1008 = vmatpush1.bf16.msra.mxu0 %v888
        %1009 = vmatprep.subr.bf16.mxu0 0
        %1010 = vmatpush1.bf16.msra.mxu0 %v887
        %1011 = vmatprep.subr.bf16.mxu0 0
        %1012 = vmatpush1.bf16.msra.mxu0 %v886
        %1013 = vmatprep.subr.bf16.mxu0 0
        %1014 = vmatpush1.bf16.msra.mxu0 %v885
        %1015 = vmatprep.subr.bf16.mxu0 0
        %1016 = vmatpush1.bf16.msra.mxu0 %v884
        %1017 = vmatprep.subr.bf16.mxu0 0
        %1018 = vmatpush1.bf16.msra.mxu0 %v883
        %1019 = vmatprep.subr.bf16.mxu0 0
        %1020 = vmatpush2.bf16.msra.mxu0 %v898
        %1021 = vmatprep.subr.bf16.mxu0 0
        %1022 = vmatpush2.bf16.msra.mxu0 %v897
        %1023 = vmatprep.subr.bf16.mxu0 0
        %1024 = vmatpush2.bf16.msra.mxu0 %v896
        %1025 = vmatprep.subr.bf16.mxu0 0
        %1026 = vmatpush2.bf16.msra.mxu0 %v895
        %1027 = vmatprep.subr.bf16.mxu0 0
        %1028 = vmatpush2.bf16.msra.mxu0 %v894
        %1029 = vmatprep.subr.bf16.mxu0 0
        %1030 = vmatpush2.bf16.msra.mxu0 %v893
        %1031 = vmatprep.subr.bf16.mxu0 0
        %1032 = vmatpush2.bf16.msra.mxu0 %v892
        %1033 = vmatprep.subr.bf16.mxu0 0
        %1034 = vmatpush2.bf16.msra.mxu0 %v891
        %1035 = vmatprep.mubr.bf16.mxu0 %v666
        %1036 = vmatmul.mubr.bf16.gmra.mxu0 %v665
        %v1037 = vpop.f32.mrf.mxu0
        %v1038 = vadd.f32 %v998, %v1037
        %v1039 = vpop.f32.mrf.mxu0
        %v1040 = vpop.f32.mrf.mxu0
        %v1041 = vpop.f32.mrf.mxu0
        %1042 = vdwg.mxu0
        %1043 = vmatprep.subr.bf16.mxu0 0
        %1044 = vmatpush1.bf16.msra.mxu0 %v906
        %1045 = vmatprep.subr.bf16.mxu0 0
        %1046 = vmatpush1.bf16.msra.mxu0 %v905
        %1047 = vmatprep.subr.bf16.mxu0 0
        %1048 = vmatpush1.bf16.msra.mxu0 %v904
        %1049 = vmatprep.subr.bf16.mxu0 0
        %1050 = vmatpush1.bf16.msra.mxu0 %v903
        %1051 = vmatprep.subr.bf16.mxu0 0
        %1052 = vmatpush1.bf16.msra.mxu0 %v902
        %1053 = vmatprep.subr.bf16.mxu0 0
        %1054 = vmatpush1.bf16.msra.mxu0 %v901
        %1055 = vmatprep.subr.bf16.mxu0 0
        %1056 = vmatpush1.bf16.msra.mxu0 %v900
        %1057 = vmatprep.subr.bf16.mxu0 0
        %1058 = vmatpush1.bf16.msra.mxu0 %v899
        %1059 = vmatprep.subr.bf16.mxu0 0
        %1060 = vmatpush2.bf16.msra.mxu0 %v914
        %1061 = vmatprep.subr.bf16.mxu0 0
        %1062 = vmatpush2.bf16.msra.mxu0 %v913
        %1063 = vmatprep.subr.bf16.mxu0 0
        %1064 = vmatpush2.bf16.msra.mxu0 %v912
        %1065 = vmatprep.subr.bf16.mxu0 0
        %1066 = vmatpush2.bf16.msra.mxu0 %v911
        %1067 = vmatprep.subr.bf16.mxu0 0
        %1068 = vmatpush2.bf16.msra.mxu0 %v910
        %1069 = vmatprep.subr.bf16.mxu0 0
        %1070 = vmatpush2.bf16.msra.mxu0 %v909
        %1071 = vmatprep.subr.bf16.mxu0 0
        %1072 = vmatpush2.bf16.msra.mxu0 %v908
        %1073 = vmatprep.subr.bf16.mxu0 0
        %1074 = vmatpush2.bf16.msra.mxu0 %v907
        %1075 = vmatprep.mubr.bf16.mxu0 %v668
        %1076 = vmatmul.mubr.bf16.gmra.mxu0 %v667
        %v1077 = vpop.f32.mrf.mxu0
        %v1078 = vadd.f32 %v1038, %v1077
        %v1079 = vpop.f32.mrf.mxu0
        %v1080 = vpop.f32.mrf.mxu0
        %v1081 = vpop.f32.mrf.mxu0
        %1082 = vdwg.mxu0
        %vm1083 = vcmask 392192
        %1084 = vst.msk [vmem:[#allocation2] sm:$0xff] %vm1083, %v1078
      $region68: #{vit_forward.1} parent=63 // pred_fallthru
        _
      %v1085 = vld [vmem:[#allocation2] sm:$0xff]
      %v1086 = vld [vmem:[%s532] sm:$0xff]
      %v1087 = vld [vmem:[%s532 + $0x8] sm:$0x1]
      %v1088 = vld [vmem:[%s522] sm:$0xff]
      %v1089 = vld [vmem:[%s522 + $0x8] sm:$0xf]
      %v1090 = vld [vmem:[%s522 + $0xc] sm:$0xff]
      %v1091 = vld [vmem:[%s522 + $0x14] sm:$0xf]
      %v1092 = vld [vmem:[%s522 + $0x18] sm:$0xff]
      %v1093 = vld [vmem:[%s522 + $0x20] sm:$0xf]
      %v1094 = vld [vmem:[%s522 + $0x24] sm:$0xff]
      %v1095 = vld [vmem:[%s522 + $0x2c] sm:$0xf]
      %v1096 = vld [vmem:[%s522 + $0x30] sm:$0xff]
      %v1097 = vld [vmem:[%s522 + $0x38] sm:$0xf]
      %v1098 = vld [vmem:[%s522 + $0x3c] sm:$0xff]
      %v1099 = vld [vmem:[%s522 + $0x44] sm:$0xf]
      %v1100 = vld [vmem:[%s3] sm:$0xff]
      %vm1101 = vcmask 392192
      %v1102 = vsel %vm1101, %v1085, 0.0
      %1103 = vadd.xlane.f32.xlu0 %v1102
      %v1104 = vpop.xlane.xlu0 %1103
      %v1105 = vrcp.pop 48.0
      %v1106 = vmul.f32 %v1104, %v1105
      %v1107 = vsub.f32 %v1085, %v1106
      %v1108 = vmul.f32 %v1107, %v1107
      %v1109 = vsel %vm1101, %v1108, 0.0
      %1110 = vadd.xlane.f32.xlu0 %v1109
      %v1111 = vpop.xlane.xlu0 %1110
      %v1112 = vmul.f32 %v1111, %v1105
      %v1113 = vadd.f32 %v1112, 1e-12
      %v1114 = vrsqrt.pop %v1113
      %v1115 = vmul.f32 %v1107, %v1114
      %v1116 = vlaneseq
      %v1117 = vshrl.u32 %v1116, 7
      %v1118 = vsub.s32 0, %v1117
      %v1119 = vrot.slane %v1086, %v1118
      %v1120 = vmul.f32 %v1115, %v1119
      %v1121 = vlaneseq
      %v1122 = vshrl.u32 %v1121, 7
      %v1123 = vsub.s32 1, %v1122
      %v1124 = vrot.slane %v1086, %v1123
      %v1125 = vadd.f32 %v1120, %v1124
      %v1126 = vpack.c.bf16 %v1125, %v1125
      %v1133 = vunpack.c.l.b16 %v1088
      %v1134 = vunpack.c.h.b16 %v1088
      %v1135 = vunpack.c.l.b16 %v1090
      %v1136 = vunpack.c.h.b16 %v1090
      %v1137 = vunpack.c.l.b16 %v1092
      %v1138 = vunpack.c.h.b16 %v1092
      %v1139 = vunpack.c.l.b16 %v1094
      %v1140 = vunpack.c.h.b16 %v1094
      %v1141 = vunpack.c.l.b16 %v1096
      %v1142 = vunpack.c.h.b16 %v1096
      %v1143 = vunpack.c.l.b16 %v1098
      %v1144 = vunpack.c.h.b16 %v1098
      %v1145 = vpack.c.b16 %v1135, %v1133
      %v1146 = vpack.c.b16 %v1136, %v1134
      %v1147 = vpack.c.b16 %v1139, %v1137
      %v1148 = vpack.c.b16 %v1140, %v1138
      %v1149 = vpack.c.b16 %v1143, %v1141
      %v1150 = vpack.c.b16 %v1144, %v1142
      %v1158 = vsel %vm1101, %v1126, 0
      %1160 = vmatprep.subr.bf16.mxu0 0
      %1161 = vmatpush1.bf16.msra.mxu0 0
      %1162 = vmatprep.subr.bf16.mxu0 0
      %1163 = vmatpush1.bf16.msra.mxu0 0
      %1164 = vmatprep.subr.bf16.mxu0 0
      %1165 = vmatpush1.bf16.msra.mxu0 0
      %1166 = vmatprep.subr.bf16.mxu0 0
      %1167 = vmatpush1.bf16.msra.mxu0 0
      %1168 = vmatprep.subr.bf16.mxu0 0
      %1169 = vmatpush1.bf16.msra.mxu0 0
      %1170 = vmatprep.subr.bf16.mxu0 %v1150
      %1171 = vmatpush1.bf16.msra.mxu0 %v1149
      %1172 = vmatprep.subr.bf16.mxu0 %v1148
      %1173 = vmatpush1.bf16.msra.mxu0 %v1147
      %1174 = vmatprep.subr.bf16.mxu0 %v1146
      %1175 = vmatpush1.bf16.msra.mxu0 %v1145
      %1176 = vmatprep.subr.bf16.mxu0 0
      %1177 = vmatpush2.bf16.msra.mxu0 0
      %1178 = vmatprep.subr.bf16.mxu0 0
      %1179 = vmatpush2.bf16.msra.mxu0 0
      %1180 = vmatprep.subr.bf16.mxu0 0
      %1181 = vmatpush2.bf16.msra.mxu0 0
      %1182 = vmatprep.subr.bf16.mxu0 0
      %1183 = vmatpush2.bf16.msra.mxu0 0
      %1184 = vmatprep.subr.bf16.mxu0 0
      %1185 = vmatpush2.bf16.msra.mxu0 0
      %1186 = vmatprep.subr.bf16.mxu0 0
      %1187 = vmatpush2.bf16.msra.mxu0 0
      %1188 = vmatprep.subr.bf16.mxu0 0
      %1189 = vmatpush2.bf16.msra.mxu0 0
      %1190 = vmatprep.subr.bf16.mxu0 0
      %1191 = vmatpush2.bf16.msra.mxu0 0
      %1192 = vmatprep.mubr.bf16.mxu0 0
      %1193 = vmatmul.mubr.bf16.gmra.mxu0 %v1158
      %v1194 = vpop.f32.mrf.mxu0
      %v1195 = vadd.f32 0.0, %v1194
      %v1196 = vpop.f32.mrf.mxu0
      %v1197 = vadd.f32 0.0, %v1196
      %v1198 = vpop.f32.mrf.mxu0
      %v1199 = vpop.f32.mrf.mxu0
      %1200 = vdwg.mxu0
      %v1201 = vlaneseq
      %v1202 = vshrl.u32 %v1201, 7
      %v1203 = vsub.s32 2, %v1202
      %v1204 = vrot.slane %v1086, %v1203
      %v1205 = vadd.f32 %v1195, %v1204
      %v1206 = vlaneseq
      %v1207 = vshrl.u32 %v1206, 7
      %v1208 = vsub.s32 3, %v1207
      %v1209 = vrot.slane %v1086, %v1208
      %1211 = vrot.lane.b32.xlu0 %v1209, 48
      %v1212 = vpop.permute.xlu0 %1211
      %v1214 = vadd.f32 %v1195, %v1212
      %v1215 = vlaneseq
      %v1216 = vshrl.u32 %v1215, 7
      %v1217 = vsub.s32 4, %v1216
      %v1218 = vrot.slane %v1086, %v1217
      %1220 = vrot.lane.b32.xlu0 %v1218, 96
      %v1221 = vpop.permute.xlu0 %1220
      %v1223 = vadd.f32 %v1195, %v1221
      %v1224 = vadd.f32 %v1197, %v1221
      %v1225 = vmul.f32 %v1205, 0.25
      %v1226 = vpack.c.bf16 %v1225, %v1225
      %v1227 = vpack.c.bf16 %v1214, %v1214
      %v1228 = vpack.c.bf16 %v1223, %v1223
      %1230 = vrot.lane.b32.xlu0 %v1227, 80
      %v1231 = vpop.permute.xlu0 %1230
      %vm1232 = vcmask 130048
      %v1234 = vsel %vm1232, %v1226, 0
      %v1237 = vsel %vm1232, %v1231, 0
      %1239 = vmatprep.subr.bf16.mxu0 0
      %1240 = vmatpush1.bf16.xpose.msra.mxu0 0
      %1241 = vmatprep.subr.bf16.mxu0 0
      %1242 = vmatpush1.bf16.xpose.msra.mxu0 0
      %1243 = vmatprep.subr.bf16.mxu0 0
      %1244 = vmatpush1.bf16.xpose.msra.mxu0 0
      %1245 = vmatprep.subr.bf16.mxu0 0
      %1246 = vmatpush1.bf16.xpose.msra.mxu0 0
      %1247 = vmatprep.subr.bf16.mxu0 0
      %1248 = vmatpush1.bf16.xpose.msra.mxu0 0
      %1249 = vmatprep.subr.bf16.mxu0 0
      %1250 = vmatpush1.bf16.xpose.msra.mxu0 0
      %1251 = vmatprep.subr.bf16.mxu0 0
      %1252 = vmatpush1.bf16.xpose.msra.mxu0 0
      %1253 = vmatprep.subr.bf16.mxu0 0
      %1254 = vmatpush1.bf16.xpose.msra.mxu0 %v1237
      %1255 = vmatprep.subr.bf16.mxu0 0
      %1256 = vmatpush2.bf16.xpose.msra.mxu0 0
      %1257 = vmatprep.subr.bf16.mxu0 0
      %1258 = vmatpush2.bf16.xpose.msra.mxu0 0
      %1259 = vmatprep.subr.bf16.mxu0 0
      %1260 = vmatpush2.bf16.xpose.msra.mxu0 0
      %1261 = vmatprep.subr.bf16.mxu0 0
      %1262 = vmatpush2.bf16.xpose.msra.mxu0 0
      %1263 = vmatprep.subr.bf16.mxu0 0
      %1264 = vmatpush2.bf16.xpose.msra.mxu0 0
      %1265 = vmatprep.subr.bf16.mxu0 0
      %1266 = vmatpush2.bf16.xpose.msra.mxu0 0
      %1267 = vmatprep.subr.bf16.mxu0 0
      %1268 = vmatpush2.bf16.xpose.msra.mxu0 0
      %1269 = vmatprep.subr.bf16.mxu0 0
      %1270 = vmatpush2.bf16.xpose.msra.mxu0 0
      %1271 = vmatprep.mubr.bf16.mxu0 0
      %1272 = vmatmul.mubr.bf16.gmra.mxu0 %v1234
      %v1273 = vpop.f32.mrf.mxu0
      %v1274 = vadd.f32 %v1100, %v1273
      %v1275 = vpop.f32.mrf.mxu0
      %v1276 = vpop.f32.mrf.mxu0
      %v1277 = vpop.f32.mrf.mxu0
      %1278 = vdwg.mxu0
      %vm1279 = vcmask 64512
      %v1280 = vsel %vm1279, %v1274, -inf
      %1281 = vmax.xlane.f32.xlu0 %v1280
      %v1282 = vpop.xlane.xlu0 %1281
      %v1283 = vsub.f32 %v1274, %v1282
      %v1284 = vmul.f32 %v1283, 1.442695
      %v1285 = vpow.pop %v1284
      %v1286 = vsel %vm1279, %v1285, 0.0
      %1287 = vadd.xlane.f32.xlu0 %v1286
      %v1288 = vpop.xlane.xlu0 %1287
      %v1289 = vrcp.pop %v1288
      %v1290 = vmul.f32 %v1285, %v1289
      %v1291 = vpack.c.bf16 %v1290, %v1290
      %1293 = vrot.lane.b32.xlu0 %v1228, 32
      %v1294 = vpop.permute.xlu0 %1293
      %v1296 = vsel %vm1279, %v1291, 0
      %vm1298 = vcmask 1043456
      %v1300 = vsel %vm1298, %v1294, 0
      %1302 = vmatprep.subr.bf16.mxu0 0
      %1303 = vmatpush1.bf16.msra.mxu0 0
      %1304 = vmatprep.subr.bf16.mxu0 0
      %1305 = vmatpush1.bf16.msra.mxu0 0
      %1306 = vmatprep.subr.bf16.mxu0 0
      %1307 = vmatpush1.bf16.msra.mxu0 0
      %1308 = vmatprep.subr.bf16.mxu0 0
      %1309 = vmatpush1.bf16.msra.mxu0 0
      %1310 = vmatprep.subr.bf16.mxu0 0
      %1311 = vmatpush1.bf16.msra.mxu0 0
      %1312 = vmatprep.subr.bf16.mxu0 0
      %1313 = vmatpush1.bf16.msra.mxu0 0
      %1314 = vmatprep.subr.bf16.mxu0 0
      %1315 = vmatpush1.bf16.msra.mxu0 0
      %1316 = vmatprep.subr.bf16.mxu0 0
      %1317 = vmatpush1.bf16.msra.mxu0 %v1300
      %1318 = vmatprep.subr.bf16.mxu0 0
      %1319 = vmatpush2.bf16.msra.mxu0 0
      %1320 = vmatprep.subr.bf16.mxu0 0
      %1321 = vmatpush2.bf16.msra.mxu0 0
      %1322 = vmatprep.subr.bf16.mxu0 0
      %1323 = vmatpush2.bf16.msra.mxu0 0
      %1324 = vmatprep.subr.bf16.mxu0 0
      %1325 = vmatpush2.bf16.msra.mxu0 0
      %1326 = vmatprep.subr.bf16.mxu0 0
      %1327 = vmatpush2.bf16.msra.mxu0 0
      %1328 = vmatprep.subr.bf16.mxu0 0
      %1329 = vmatpush2.bf16.msra.mxu0 0
      %1330 = vmatprep.subr.bf16.mxu0 0
      %1331 = vmatpush2.bf16.msra.mxu0 0
      %1332 = vmatprep.subr.bf16.mxu0 0
      %1333 = vmatpush2.bf16.msra.mxu0 0
      %1334 = vmatprep.mubr.bf16.mxu0 0
      %1335 = vmatmul.mubr.bf16.gmra.mxu0 %v1296
      %v1336 = vpop.f32.mrf.mxu0
      %v1337 = vadd.f32 0.0, %v1336
      %v1338 = vpop.f32.mrf.mxu0
      %v1339 = vpop.f32.mrf.mxu0
      %v1340 = vpop.f32.mrf.mxu0
      %1341 = vdwg.mxu0
      %1343 = vrot.lane.b32.xlu0 %v1226, 112
      %v1344 = vpop.permute.xlu0 %1343
      %1345 = vrot.lane.b32.xlu0 %v1227, 64
      %v1346 = vpop.permute.xlu0 %1345
      %v1348 = vsel %vm1232, %v1344, 0
      %v1351 = vsel %vm1232, %v1346, 0
      %1353 = vmatprep.subr.bf16.mxu0 0
      %1354 = vmatpush1.bf16.xpose.msra.mxu0 0
      %1355 = vmatprep.subr.bf16.mxu0 0
      %1356 = vmatpush1.bf16.xpose.msra.mxu0 0
      %1357 = vmatprep.subr.bf16.mxu0 0
      %1358 = vmatpush1.bf16.xpose.msra.mxu0 0
      %1359 = vmatprep.subr.bf16.mxu0 0
      %1360 = vmatpush1.bf16.xpose.msra.mxu0 0
      %1361 = vmatprep.subr.bf16.mxu0 0
      %1362 = vmatpush1.bf16.xpose.msra.mxu0 0
      %1363 = vmatprep.subr.bf16.mxu0 0
      %1364 = vmatpush1.bf16.xpose.msra.mxu0 0
      %1365 = vmatprep.subr.bf16.mxu0 0
      %1366 = vmatpush1.bf16.xpose.msra.mxu0 0
      %1367 = vmatprep.subr.bf16.mxu0 0
      %1368 = vmatpush1.bf16.xpose.msra.mxu0 %v1351
      %1369 = vmatprep.subr.bf16.mxu0 0
      %1370 = vmatpush2.bf16.xpose.msra.mxu0 0
      %1371 = vmatprep.subr.bf16.mxu0 0
      %1372 = vmatpush2.bf16.xpose.msra.mxu0 0
      %1373 = vmatprep.subr.bf16.mxu0 0
      %1374 = vmatpush2.bf16.xpose.msra.mxu0 0
      %1375 = vmatprep.subr.bf16.mxu0 0
      %1376 = vmatpush2.bf16.xpose.msra.mxu0 0
      %1377 = vmatprep.subr.bf16.mxu0 0
      %1378 = vmatpush2.bf16.xpose.msra.mxu0 0
      %1379 = vmatprep.subr.bf16.mxu0 0
      %1380 = vmatpush2.bf16.xpose.msra.mxu0 0
      %1381 = vmatprep.subr.bf16.mxu0 0
      %1382 = vmatpush2.bf16.xpose.msra.mxu0 0
      %1383 = vmatprep.subr.bf16.mxu0 0
      %1384 = vmatpush2.bf16.xpose.msra.mxu0 0
      %1385 = vmatprep.mubr.bf16.mxu0 0
      %1386 = vmatmul.mubr.bf16.gmra.mxu0 %v1348
      %v1387 = vpop.f32.mrf.mxu0
      %v1388 = vadd.f32 %v1100, %v1387
      %v1389 = vpop.f32.mrf.mxu0
      %v1390 = vpop.f32.mrf.mxu0
      %v1391 = vpop.f32.mrf.mxu0
      %1392 = vdwg.mxu0
      %v1393 = vsel %vm1279, %v1388, -inf
      %1394 = vmax.xlane.f32.xlu0 %v1393
      %v1395 = vpop.xlane.xlu0 %1394
      %v1396 = vsub.f32 %v1388, %v1395
      %v1397 = vmul.f32 %v1396, 1.442695
      %v1398 = vpow.pop %v1397
      %v1399 = vsel %vm1279, %v1398, 0.0
      %1400 = vadd.xlane.f32.xlu0 %v1399
      %v1401 = vpop.xlane.xlu0 %1400
      %v1402 = vrcp.pop %v1401
      %v1403 = vmul.f32 %v1398, %v1402
      %v1404 = vpack.c.bf16 %v1403, %v1403
      %1405 = vrot.lane.b32.xlu0 %v1228, 16
      %v1406 = vpop.permute.xlu0 %1405
      %v1408 = vsel %vm1279, %v1404, 0
      %v1411 = vsel %vm1298, %v1406, 0
      %1413 = vmatprep.subr.bf16.mxu0 0
      %1414 = vmatpush1.bf16.msra.mxu0 0
      %1415 = vmatprep.subr.bf16.mxu0 0
      %1416 = vmatpush1.bf16.msra.mxu0 0
      %1417 = vmatprep.subr.bf16.mxu0 0
      %1418 = vmatpush1.bf16.msra.mxu0 0
      %1419 = vmatprep.subr.bf16.mxu0 0
      %1420 = vmatpush1.bf16.msra.mxu0 0
      %1421 = vmatprep.subr.bf16.mxu0 0
      %1422 = vmatpush1.bf16.msra.mxu0 0
      %1423 = vmatprep.subr.bf16.mxu0 0
      %1424 = vmatpush1.bf16.msra.mxu0 0
      %1425 = vmatprep.subr.bf16.mxu0 0
      %1426 = vmatpush1.bf16.msra.mxu0 0
      %1427 = vmatprep.subr.bf16.mxu0 0
      %1428 = vmatpush1.bf16.msra.mxu0 %v1411
      %1429 = vmatprep.subr.bf16.mxu0 0
      %1430 = vmatpush2.bf16.msra.mxu0 0
      %1431 = vmatprep.subr.bf16.mxu0 0
      %1432 = vmatpush2.bf16.msra.mxu0 0
      %1433 = vmatprep.subr.bf16.mxu0 0
      %1434 = vmatpush2.bf16.msra.mxu0 0
      %1435 = vmatprep.subr.bf16.mxu0 0
      %1436 = vmatpush2.bf16.msra.mxu0 0
      %1437 = vmatprep.subr.bf16.mxu0 0
      %1438 = vmatpush2.bf16.msra.mxu0 0
      %1439 = vmatprep.subr.bf16.mxu0 0
      %1440 = vmatpush2.bf16.msra.mxu0 0
      %1441 = vmatprep.subr.bf16.mxu0 0
      %1442 = vmatpush2.bf16.msra.mxu0 0
      %1443 = vmatprep.subr.bf16.mxu0 0
      %1444 = vmatpush2.bf16.msra.mxu0 0
      %1445 = vmatprep.mubr.bf16.mxu0 0
      %1446 = vmatmul.mubr.bf16.gmra.mxu0 %v1408
      %v1447 = vpop.f32.mrf.mxu0
      %v1448 = vadd.f32 0.0, %v1447
      %v1449 = vpop.f32.mrf.mxu0
      %v1450 = vpop.f32.mrf.mxu0
      %v1451 = vpop.f32.mrf.mxu0
      %1452 = vdwg.mxu0
      %v1453 = vpack.c.bf16 %v1224, %v1224
      %1454 = vrot.lane.b32.xlu0 %v1226, 96
      %v1455 = vpop.permute.xlu0 %1454
      %1456 = vrot.lane.b32.xlu0 %v1227, 48
      %v1457 = vpop.permute.xlu0 %1456
      %v1459 = vsel %vm1232, %v1455, 0
      %v1462 = vsel %vm1232, %v1457, 0
      %1464 = vmatprep.subr.bf16.mxu0 0
      %1465 = vmatpush1.bf16.xpose.msra.mxu0 0
      %1466 = vmatprep.subr.bf16.mxu0 0
      %1467 = vmatpush1.bf16.xpose.msra.mxu0 0
      %1468 = vmatprep.subr.bf16.mxu0 0
      %1469 = vmatpush1.bf16.xpose.msra.mxu0 0
      %1470 = vmatprep.subr.bf16.mxu0 0
      %1471 = vmatpush1.bf16.xpose.msra.mxu0 0
      %1472 = vmatprep.subr.bf16.mxu0 0
      %1473 = vmatpush1.bf16.xpose.msra.mxu0 0
      %1474 = vmatprep.subr.bf16.mxu0 0
      %1475 = vmatpush1.bf16.xpose.msra.mxu0 0
      %1476 = vmatprep.subr.bf16.mxu0 0
      %1477 = vmatpush1.bf16.xpose.msra.mxu0 0
      %1478 = vmatprep.subr.bf16.mxu0 0
      %1479 = vmatpush1.bf16.xpose.msra.mxu0 %v1462
      %1480 = vmatprep.subr.bf16.mxu0 0
      %1481 = vmatpush2.bf16.xpose.msra.mxu0 0
      %1482 = vmatprep.subr.bf16.mxu0 0
      %1483 = vmatpush2.bf16.xpose.msra.mxu0 0
      %1484 = vmatprep.subr.bf16.mxu0 0
      %1485 = vmatpush2.bf16.xpose.msra.mxu0 0
      %1486 = vmatprep.subr.bf16.mxu0 0
      %1487 = vmatpush2.bf16.xpose.msra.mxu0 0
      %1488 = vmatprep.subr.bf16.mxu0 0
      %1489 = vmatpush2.bf16.xpose.msra.mxu0 0
      %1490 = vmatprep.subr.bf16.mxu0 0
      %1491 = vmatpush2.bf16.xpose.msra.mxu0 0
      %1492 = vmatprep.subr.bf16.mxu0 0
      %1493 = vmatpush2.bf16.xpose.msra.mxu0 0
      %1494 = vmatprep.subr.bf16.mxu0 0
      %1495 = vmatpush2.bf16.xpose.msra.mxu0 0
      %1496 = vmatprep.mubr.bf16.mxu0 0
      %1497 = vmatmul.mubr.bf16.gmra.mxu0 %v1459
      %v1498 = vpop.f32.mrf.mxu0
      %v1499 = vadd.f32 %v1100, %v1498
      %v1500 = vpop.f32.mrf.mxu0
      %v1501 = vpop.f32.mrf.mxu0
      %v1502 = vpop.f32.mrf.mxu0
      %1503 = vdwg.mxu0
      %v1504 = vsel %vm1279, %v1499, -inf
      %1505 = vmax.xlane.f32.xlu0 %v1504
      %v1506 = vpop.xlane.xlu0 %1505
      %v1507 = vsub.f32 %v1499, %v1506
      %v1508 = vmul.f32 %v1507, 1.442695
      %v1509 = vpow.pop %v1508
      %v1510 = vsel %vm1279, %v1509, 0.0
      %1511 = vadd.xlane.f32.xlu0 %v1510
      %v1512 = vpop.xlane.xlu0 %1511
      %v1513 = vrcp.pop %v1512
      %v1514 = vmul.f32 %v1509, %v1513
      %v1515 = vpack.c.bf16 %v1514, %v1514
      %v1517 = vsel %vm1279, %v1515, 0
      %v1520 = vsel %vm1298, %v1453, 0
      %1522 = vmatprep.subr.bf16.mxu0 0
      %1523 = vmatpush1.bf16.msra.mxu0 0
      %1524 = vmatprep.subr.bf16.mxu0 0
      %1525 = vmatpush1.bf16.msra.mxu0 0
      %1526 = vmatprep.subr.bf16.mxu0 0
      %1527 = vmatpush1.bf16.msra.mxu0 0
      %1528 = vmatprep.subr.bf16.mxu0 0
      %1529 = vmatpush1.bf16.msra.mxu0 0
      %1530 = vmatprep.subr.bf16.mxu0 0
      %1531 = vmatpush1.bf16.msra.mxu0 0
      %1532 = vmatprep.subr.bf16.mxu0 0
      %1533 = vmatpush1.bf16.msra.mxu0 0
      %1534 = vmatprep.subr.bf16.mxu0 0
      %1535 = vmatpush1.bf16.msra.mxu0 0
      %1536 = vmatprep.subr.bf16.mxu0 0
      %1537 = vmatpush1.bf16.msra.mxu0 %v1520
      %1538 = vmatprep.subr.bf16.mxu0 0
      %1539 = vmatpush2.bf16.msra.mxu0 0
      %1540 = vmatprep.subr.bf16.mxu0 0
      %1541 = vmatpush2.bf16.msra.mxu0 0
      %1542 = vmatprep.subr.bf16.mxu0 0
      %1543 = vmatpush2.bf16.msra.mxu0 0
      %1544 = vmatprep.subr.bf16.mxu0 0
      %1545 = vmatpush2.bf16.msra.mxu0 0
      %1546 = vmatprep.subr.bf16.mxu0 0
      %1547 = vmatpush2.bf16.msra.mxu0 0
      %1548 = vmatprep.subr.bf16.mxu0 0
      %1549 = vmatpush2.bf16.msra.mxu0 0
      %1550 = vmatprep.subr.bf16.mxu0 0
      %1551 = vmatpush2.bf16.msra.mxu0 0
      %1552 = vmatprep.subr.bf16.mxu0 0
      %1553 = vmatpush2.bf16.msra.mxu0 0
      %1554 = vmatprep.mubr.bf16.mxu0 0
      %1555 = vmatmul.mubr.bf16.gmra.mxu0 %v1517
      %v1556 = vpop.f32.mrf.mxu0
      %v1557 = vadd.f32 0.0, %v1556
      %v1558 = vpop.f32.mrf.mxu0
      %v1559 = vpop.f32.mrf.mxu0
      %v1560 = vpop.f32.mrf.mxu0
      %1561 = vdwg.mxu0
      %1563 = vrot.lane.b32.xlu0 %v1448, 16
      %v1564 = vpop.permute.xlu0 %1563
      %1567 = vrot.lane.b32.xlu0 %v1557, 32
      %v1568 = vpop.permute.xlu0 %1567
      %v1570 = vsel %vm1232, %v1337, %v1564
      %vm1571 = vcmask 261120
      %v1572 = vsel %vm1571, %v1570, %v1568
      %v1573 = vpack.c.bf16 %v1572, %v1572
      %v1574 = vlaneseq
      %v1575 = vshrl.u32 %v1574, 7
      %v1576 = vsub.s32 5, %v1575
      %v1577 = vrot.slane %v1086, %v1576
      %1578 = vrot.lane.b32.xlu0 %v1146, 112
      %v1579 = vpop.permute.xlu0 %1578
      %1580 = vrot.lane.b32.xlu0 %v1148, 112
      %v1581 = vpop.permute.xlu0 %1580
      %1582 = vrot.lane.b32.xlu0 %v1150, 112
      %v1583 = vpop.permute.xlu0 %1582
      %v1588 = vsel %vm1101, %v1573, 0
      %1590 = vmatprep.subr.bf16.mxu0 0
      %1591 = vmatpush1.bf16.msra.mxu0 0
      %1592 = vmatprep.subr.bf16.mxu0 0
      %1593 = vmatpush1.bf16.msra.mxu0 0
      %1594 = vmatprep.subr.bf16.mxu0 0
      %1595 = vmatpush1.bf16.msra.mxu0 0
      %1596 = vmatprep.subr.bf16.mxu0 0
      %1597 = vmatpush1.bf16.msra.mxu0 0
      %1598 = vmatprep.subr.bf16.mxu0 0
      %1599 = vmatpush1.bf16.msra.mxu0 0
      %1600 = vmatprep.subr.bf16.mxu0 0
      %1601 = vmatpush1.bf16.msra.mxu0 %v1583
      %1602 = vmatprep.subr.bf16.mxu0 0
      %1603 = vmatpush1.bf16.msra.mxu0 %v1581
      %1604 = vmatprep.subr.bf16.mxu0 0
      %1605 = vmatpush1.bf16.msra.mxu0 %v1579
      %1606 = vmatprep.subr.bf16.mxu0 0
      %1607 = vmatpush2.bf16.msra.mxu0 0
      %1608 = vmatprep.subr.bf16.mxu0 0
      %1609 = vmatpush2.bf16.msra.mxu0 0
      %1610 = vmatprep.subr.bf16.mxu0 0
      %1611 = vmatpush2.bf16.msra.mxu0 0
      %1612 = vmatprep.subr.bf16.mxu0 0
      %1613 = vmatpush2.bf16.msra.mxu0 0
      %1614 = vmatprep.subr.bf16.mxu0 0
      %1615 = vmatpush2.bf16.msra.mxu0 0
      %1616 = vmatprep.subr.bf16.mxu0 0
      %1617 = vmatpush2.bf16.msra.mxu0 0
      %1618 = vmatprep.subr.bf16.mxu0 0
      %1619 = vmatpush2.bf16.msra.mxu0 0
      %1620 = vmatprep.subr.bf16.mxu0 0
      %1621 = vmatpush2.bf16.msra.mxu0 0
      %1622 = vmatprep.mubr.bf16.mxu0 0
      %1623 = vmatmul.mubr.bf16.gmra.mxu0 %v1588
      %v1624 = vpop.f32.mrf.mxu0
      %v1625 = vadd.f32 %v1577, %v1624
      %v1626 = vpop.f32.mrf.mxu0
      %v1627 = vpop.f32.mrf.mxu0
      %v1628 = vpop.f32.mrf.mxu0
      %1629 = vdwg.mxu0
      %v1630 = vadd.f32 %v1085, %v1625
      %v1631 = vsel %vm1101, %v1630, 0.0
      %1632 = vadd.xlane.f32.xlu0 %v1631
      %v1633 = vpop.xlane.xlu0 %1632
      %v1634 = vmul.f32 %v1633, %v1105
      %v1635 = vsub.f32 %v1630, %v1634
      %v1636 = vmul.f32 %v1635, %v1635
      %v1637 = vsel %vm1101, %v1636, 0.0
      %1638 = vadd.xlane.f32.xlu0 %v1637
      %v1639 = vpop.xlane.xlu0 %1638
      %v1640 = vmul.f32 %v1639, %v1105
      %v1641 = vadd.f32 %v1640, 1e-12
      %v1642 = vrsqrt.pop %v1641
      %v1643 = vmul.f32 %v1635, %v1642
      %v1644 = vlaneseq
      %v1645 = vshrl.u32 %v1644, 7
      %v1646 = vsub.s32 6, %v1645
      %v1647 = vrot.slane %v1086, %v1646
      %v1648 = vmul.f32 %v1643, %v1647
      %v1649 = vlaneseq
      %v1650 = vshrl.u32 %v1649, 7
      %v1651 = vsub.s32 7, %v1650
      %v1652 = vrot.slane %v1086, %v1651
      %v1653 = vadd.f32 %v1648, %v1652
      %v1654 = vpack.c.bf16 %v1653, %v1653
      %v1655 = vld [vmem:[%s536] sm:$0x3]
      %v1657 = vlaneseq
      %v1658 = vshrl.u32 %v1657, 7
      %v1659 = vsub.s32 0, %v1658
      %v1660 = vrot.slane %v1655, %v1659
      %v1661 = vlaneseq
      %v1662 = vshrl.u32 %v1661, 7
      %v1663 = vsub.s32 1, %v1662
      %v1664 = vrot.slane %v1655, %v1663
      %v1673 = vunpack.c.l.b16 %v1089
      %v1674 = vunpack.c.l.b16 %v1091
      %v1675 = vunpack.c.l.b16 %v1093
      %v1676 = vunpack.c.l.b16 %v1095
      %v1677 = vunpack.c.l.b16 %v1097
      %v1678 = vunpack.c.l.b16 %v1099
      %v1679 = vpack.c.b16 %v1674, %v1673
      %v1680 = vpack.c.b16 %v1676, %v1675
      %v1681 = vpack.c.b16 %v1678, %v1677
      %1682 = vrot.lane.b32.xlu0 %v1146, 64
      %v1683 = vpop.permute.xlu0 %1682
      %1684 = vrot.lane.b32.xlu0 %v1679, 64
      %v1685 = vpop.permute.xlu0 %1684
      %1686 = vrot.lane.b32.xlu0 %v1148, 64
      %v1687 = vpop.permute.xlu0 %1686
      %1688 = vrot.lane.b32.xlu0 %v1680, 64
      %v1689 = vpop.permute.xlu0 %1688
      %1690 = vrot.lane.b32.xlu0 %v1150, 64
      %v1691 = vpop.permute.xlu0 %1690
      %1692 = vrot.lane.b32.xlu0 %v1681, 64
      %v1693 = vpop.permute.xlu0 %1692
      %vm1694 = vcmask 523264
      %v1695 = vsel %vm1694, %v1683, %v1685
      %v1696 = vsel %vm1694, %v1687, %v1689
      %v1697 = vsel %vm1694, %v1691, %v1693
      %v1705 = vsel %vm1101, %v1654, 0
      %1707 = vmatprep.subr.bf16.mxu0 0
      %1708 = vmatpush1.bf16.msra.mxu0 0
      %1709 = vmatprep.subr.bf16.mxu0 0
      %1710 = vmatpush1.bf16.msra.mxu0 0
      %1711 = vmatprep.subr.bf16.mxu0 0
      %1712 = vmatpush1.bf16.msra.mxu0 0
      %1713 = vmatprep.subr.bf16.mxu0 0
      %1714 = vmatpush1.bf16.msra.mxu0 0
      %1715 = vmatprep.subr.bf16.mxu0 0
      %1716 = vmatpush1.bf16.msra.mxu0 0
      %1717 = vmatprep.subr.bf16.mxu0 %v1693
      %1718 = vmatpush1.bf16.msra.mxu0 %v1697
      %1719 = vmatprep.subr.bf16.mxu0 %v1689
      %1720 = vmatpush1.bf16.msra.mxu0 %v1696
      %1721 = vmatprep.subr.bf16.mxu0 %v1685
      %1722 = vmatpush1.bf16.msra.mxu0 %v1695
      %1723 = vmatprep.subr.bf16.mxu0 0
      %1724 = vmatpush2.bf16.msra.mxu0 0
      %1725 = vmatprep.subr.bf16.mxu0 0
      %1726 = vmatpush2.bf16.msra.mxu0 0
      %1727 = vmatprep.subr.bf16.mxu0 0
      %1728 = vmatpush2.bf16.msra.mxu0 0
      %1729 = vmatprep.subr.bf16.mxu0 0
      %1730 = vmatpush2.bf16.msra.mxu0 0
      %1731 = vmatprep.subr.bf16.mxu0 0
      %1732 = vmatpush2.bf16.msra.mxu0 0
      %1733 = vmatprep.subr.bf16.mxu0 0
      %1734 = vmatpush2.bf16.msra.mxu0 0
      %1735 = vmatprep.subr.bf16.mxu0 0
      %1736 = vmatpush2.bf16.msra.mxu0 0
      %1737 = vmatprep.subr.bf16.mxu0 0
      %1738 = vmatpush2.bf16.msra.mxu0 0
      %1739 = vmatprep.mubr.bf16.mxu0 0
      %1740 = vmatmul.mubr.bf16.gmra.mxu0 %v1705
      %v1741 = vpop.f32.mrf.mxu0
      %v1742 = vadd.f32 %v1660, %v1741
      %v1743 = vpop.f32.mrf.mxu0
      %v1744 = vadd.f32 %v1664, %v1743
      %v1745 = vpop.f32.mrf.mxu0
      %v1746 = vpop.f32.mrf.mxu0
      %1747 = vdwg.mxu0
      %v1748 = vmul.f32 %v1742, %v1742
      %v1749 = vmul.f32 %v1744, %v1744
      %v1750 = vmul.f32 %v1742, %v1748
      %v1751 = vmul.f32 %v1744, %v1749
      %v1752 = vmul.f32 %v1750, 0.044715
      %v1753 = vmul.f32 %v1751, 0.044715
      %v1754 = vadd.f32 %v1742, %v1752
      %v1755 = vadd.f32 %v1744, %v1753
      %v1756 = vmul.f32 %v1754, 0.7978846
      %v1757 = vmul.f32 %v1755, 0.7978846
      %v1758 = vtanh.pop %v1756
      %v1759 = vtanh.pop %v1757
      %v1760 = vadd.f32 %v1758, 1.0
      %v1761 = vadd.f32 %v1759, 1.0
      %v1762 = vmul.f32 %v1760, 0.5
      %v1763 = vmul.f32 %v1761, 0.5
      %v1764 = vmul.f32 %v1742, %v1762
      %v1765 = vmul.f32 %v1744, %v1763
      %v1766 = vpack.c.bf16 %v1764, %v1764
      %v1767 = vpack.c.bf16 %v1765, %v1765
      %v1768 = vld [vmem:[%s527] sm:$0xf]
      %v1769 = vld [vmem:[%s527 + $0x4] sm:$0xf]
      %v1770 = vld [vmem:[%s527 + $0x8] sm:$0xf]
      %v1771 = vld [vmem:[%s527 + $0xc] sm:$0xf]
      %v1772 = vld [vmem:[%s527 + $0x10] sm:$0xf]
      %v1773 = vld [vmem:[%s527 + $0x14] sm:$0xf]
      %v1774 = vld [vmem:[%s527 + $0x18] sm:$0xf]
      %v1775 = vld [vmem:[%s527 + $0x1c] sm:$0xf]
      %v1776 = vld [vmem:[%s527 + $0x20] sm:$0xf]
      %v1777 = vld [vmem:[%s527 + $0x24] sm:$0xf]
      %v1778 = vld [vmem:[%s527 + $0x28] sm:$0xf]
      %v1779 = vld [vmem:[%s527 + $0x2c] sm:$0xf]
      %v1780 = vld [vmem:[%s527 + $0x30] sm:$0xf]
      %v1781 = vld [vmem:[%s527 + $0x34] sm:$0xf]
      %v1782 = vld [vmem:[%s527 + $0x38] sm:$0xf]
      %v1783 = vld [vmem:[%s527 + $0x3c] sm:$0xf]
      %v1784 = vld [vmem:[%s527 + $0x40] sm:$0xf]
      %v1785 = vld [vmem:[%s527 + $0x44] sm:$0xf]
      %v1786 = vld [vmem:[%s527 + $0x48] sm:$0xf]
      %v1787 = vld [vmem:[%s527 + $0x4c] sm:$0xf]
      %v1788 = vld [vmem:[%s527 + $0x50] sm:$0xf]
      %v1789 = vld [vmem:[%s527 + $0x54] sm:$0xf]
      %v1790 = vld [vmem:[%s527 + $0x58] sm:$0xf]
      %v1791 = vld [vmem:[%s527 + $0x5c] sm:$0xf]
      %v1792 = vlaneseq
      %v1793 = vshrl.u32 %v1792, 7
      %v1794 = vsub.s32 0, %v1793
      %v1795 = vrot.slane %v1087, %v1794
      %v1820 = vunpack.c.l.b16 %v1768
      %v1821 = vunpack.c.l.b16 %v1769
      %v1822 = vunpack.c.l.b16 %v1770
      %v1823 = vunpack.c.l.b16 %v1771
      %v1824 = vunpack.c.l.b16 %v1772
      %v1825 = vunpack.c.l.b16 %v1773
      %v1826 = vunpack.c.l.b16 %v1774
      %v1827 = vunpack.c.l.b16 %v1775
      %v1828 = vunpack.c.l.b16 %v1776
      %v1829 = vunpack.c.l.b16 %v1777
      %v1830 = vunpack.c.l.b16 %v1778
      %v1831 = vunpack.c.l.b16 %v1779
      %v1832 = vunpack.c.l.b16 %v1780
      %v1833 = vunpack.c.l.b16 %v1781
      %v1834 = vunpack.c.l.b16 %v1782
      %v1835 = vunpack.c.l.b16 %v1783
      %v1836 = vunpack.c.l.b16 %v1784
      %v1837 = vunpack.c.l.b16 %v1785
      %v1838 = vunpack.c.l.b16 %v1786
      %v1839 = vunpack.c.l.b16 %v1787
      %v1840 = vunpack.c.l.b16 %v1788
      %v1841 = vunpack.c.l.b16 %v1789
      %v1842 = vunpack.c.l.b16 %v1790
      %v1843 = vunpack.c.l.b16 %v1791
      %v1844 = vpack.c.b16 %v1821, %v1820
      %v1845 = vpack.c.b16 %v1823, %v1822
      %v1846 = vpack.c.b16 %v1825, %v1824
      %v1847 = vpack.c.b16 %v1827, %v1826
      %v1848 = vpack.c.b16 %v1829, %v1828
      %v1849 = vpack.c.b16 %v1831, %v1830
      %v1850 = vpack.c.b16 %v1833, %v1832
      %v1851 = vpack.c.b16 %v1835, %v1834
      %v1852 = vpack.c.b16 %v1837, %v1836
      %v1853 = vpack.c.b16 %v1839, %v1838
      %v1854 = vpack.c.b16 %v1841, %v1840
      %v1855 = vpack.c.b16 %v1843, %v1842
      %vm1868 = vcmask 523264
      %v1870 = vsel %vm1868, %v1767, 0
      %1872 = vmatprep.subr.bf16.mxu0 0
      %1873 = vmatpush1.bf16.msra.mxu0 %v1851
      %1874 = vmatprep.subr.bf16.mxu0 0
      %1875 = vmatpush1.bf16.msra.mxu0 %v1850
      %1876 = vmatprep.subr.bf16.mxu0 0
      %1877 = vmatpush1.bf16.msra.mxu0 %v1849
      %1878 = vmatprep.subr.bf16.mxu0 0
      %1879 = vmatpush1.bf16.msra.mxu0 %v1848
      %1880 = vmatprep.subr.bf16.mxu0 0
      %1881 = vmatpush1.bf16.msra.mxu0 %v1847
      %1882 = vmatprep.subr.bf16.mxu0 0
      %1883 = vmatpush1.bf16.msra.mxu0 %v1846
      %1884 = vmatprep.subr.bf16.mxu0 0
      %1885 = vmatpush1.bf16.msra.mxu0 %v1845
      %1886 = vmatprep.subr.bf16.mxu0 0
      %1887 = vmatpush1.bf16.msra.mxu0 %v1844
      %1888 = vmatprep.subr.bf16.mxu0 0
      %1889 = vmatpush2.bf16.msra.mxu0 0
      %1890 = vmatprep.subr.bf16.mxu0 0
      %1891 = vmatpush2.bf16.msra.mxu0 0
      %1892 = vmatprep.subr.bf16.mxu0 0
      %1893 = vmatpush2.bf16.msra.mxu0 0
      %1894 = vmatprep.subr.bf16.mxu0 0
      %1895 = vmatpush2.bf16.msra.mxu0 0
      %1896 = vmatprep.subr.bf16.mxu0 0
      %1897 = vmatpush2.bf16.msra.mxu0 %v1855
      %1898 = vmatprep.subr.bf16.mxu0 0
      %1899 = vmatpush2.bf16.msra.mxu0 %v1854
      %1900 = vmatprep.subr.bf16.mxu0 0
      %1901 = vmatpush2.bf16.msra.mxu0 %v1853
      %1902 = vmatprep.subr.bf16.mxu0 0
      %1903 = vmatpush2.bf16.msra.mxu0 %v1852
      %1904 = vmatprep.mubr.bf16.mxu0 %v1870
      %1905 = vmatmul.mubr.bf16.gmra.mxu0 %v1766
      %v1906 = vpop.f32.mrf.mxu0
      %v1907 = vadd.f32 %v1795, %v1906
      %v1908 = vpop.f32.mrf.mxu0
      %v1909 = vpop.f32.mrf.mxu0
      %v1910 = vpop.f32.mrf.mxu0
      %1911 = vdwg.mxu0
      %v1912 = vadd.f32 %v1630, %v1907
      %1913 = vst.msk [vmem:[#allocation2] sm:$0xff] %vm1101, %v1912
      %p1914 = scmp.eq.s32.totalorder %s30, 1
      // Predicated region
      $region69: #{vit_forward.1} parent=63 // pred_check
        %p1915 = pneg %p1914
      $region70: #{vit_forward.1} parent=63 // pred_check_branch
        %1917 = sbr.rel (%p1915) target = $region72
      $region71: #{vit_forward.1} parent=63 // pred_region
        %v1918 = vld [vmem:[%s4] sm:$0x1]
        %v1919 = vld [vmem:[%s4 + $0x1] sm:$0x1]
        %vm1920 = vcmask 385024
        %v1921 = vsel %vm1920, %v1912, 0.0
        %1922 = vadd.xlane.f32.xlu0 %v1921
        %v1923 = vpop.xlane.xlu0 %1922
        %v1924 = vmul.f32 %v1923, %v1105
        %v1925 = vsub.f32 %v1912, %v1924
        %v1926 = vmul.f32 %v1925, %v1925
        %v1927 = vsel %vm1920, %v1926, 0.0
        %1928 = vadd.xlane.f32.xlu0 %v1927
        %v1929 = vpop.xlane.xlu0 %1928
        %v1930 = vmul.f32 %v1929, %v1105
        %v1931 = vadd.f32 %v1930, 1e-12
        %v1932 = vrsqrt.pop %v1931
        %v1933 = vmul.f32 %v1925, %v1932
        %v1934 = vmul.f32 %v1933, %v1918
        %v1935 = vadd.f32 %v1934, %v1919
        %v1936 = vld [vmem:[%s5] sm:$0xff]
        %v1937 = vld [vmem:[%s5 + $0x8] sm:$0xff]
        %v1938 = vld [vmem:[%s5 + $0x10] sm:$0xff]
        %v1939 = vld [vmem:[%s5 + $0x18] sm:$0xff]
        %v1940 = vld [vmem:[%s5 + $0x20] sm:$0xff]
        %v1941 = vld [vmem:[%s5 + $0x28] sm:$0xff]
        %v1942 = vld [vmem:[%s6] sm:$0x1]
        %v1944 = vsel %vm1101, %v1935, 0
        %1946 = vmatprep.subr.mxu0 0.0
        %1947 = vmatpush1.msra.mxu0 0.0
        %1948 = vmatprep.subr.mxu0 0.0
        %1949 = vmatpush1.msra.mxu0 0.0
        %1950 = vmatprep.subr.mxu0 0.0
        %1951 = vmatpush1.msra.mxu0 0.0
        %1952 = vmatprep.subr.mxu0 0.0
        %1953 = vmatpush1.msra.mxu0 0.0
        %1954 = vmatprep.subr.mxu0 0.0
        %1955 = vmatpush1.msra.mxu0 0.0
        %1956 = vmatprep.subr.mxu0 0.0
        %1957 = vmatpush1.msra.mxu0 0.0
        %1958 = vmatprep.subr.mxu0 0.0
        %1959 = vmatpush1.msra.mxu0 0.0
        %1960 = vmatprep.subr.mxu0 0.0
        %1961 = vmatpush1.msra.mxu0 0.0
        %1962 = vmatprep.subr.mxu0 0.0
        %1963 = vmatpush1.msra.mxu0 0.0
        %1964 = vmatprep.subr.mxu0 0.0
        %1965 = vmatpush1.msra.mxu0 0.0
        %1966 = vmatprep.subr.mxu0 0.0
        %1967 = vmatpush1.msra.mxu0 %v1941
        %1968 = vmatprep.subr.mxu0 0.0
        %1969 = vmatpush1.msra.mxu0 %v1940
        %1970 = vmatprep.subr.mxu0 0.0
        %1971 = vmatpush1.msra.mxu0 %v1939
        %1972 = vmatprep.subr.mxu0 0.0
        %1973 = vmatpush1.msra.mxu0 %v1938
        %1974 = vmatprep.subr.mxu0 0.0
        %1975 = vmatpush1.msra.mxu0 %v1937
        %1976 = vmatprep.subr.mxu0 0.0
        %1977 = vmatpush1.msra.mxu0 %v1936
        %1978 = vmatprep.subr.mxu0 0.0
        %1979 = vmatpush2.msra.mxu0 0.0
        %1980 = vmatprep.subr.mxu0 0.0
        %1981 = vmatpush2.msra.mxu0 0.0
        %1982 = vmatprep.subr.mxu0 0.0
        %1983 = vmatpush2.msra.mxu0 0.0
        %1984 = vmatprep.subr.mxu0 0.0
        %1985 = vmatpush2.msra.mxu0 0.0
        %1986 = vmatprep.subr.mxu0 0.0
        %1987 = vmatpush2.msra.mxu0 0.0
        %1988 = vmatprep.subr.mxu0 0.0
        %1989 = vmatpush2.msra.mxu0 0.0
        %1990 = vmatprep.subr.mxu0 0.0
        %1991 = vmatpush2.msra.mxu0 0.0
        %1992 = vmatprep.subr.mxu0 0.0
        %1993 = vmatpush2.msra.mxu0 0.0
        %1994 = vmatprep.subr.mxu0 0.0
        %1995 = vmatpush2.msra.mxu0 0.0
        %1996 = vmatprep.subr.mxu0 0.0
        %1997 = vmatpush2.msra.mxu0 0.0
        %1998 = vmatprep.subr.mxu0 0.0
        %1999 = vmatpush2.msra.mxu0 0.0
        %2000 = vmatprep.subr.mxu0 0.0
        %2001 = vmatpush2.msra.mxu0 0.0
        %2002 = vmatprep.subr.mxu0 0.0
        %2003 = vmatpush2.msra.mxu0 0.0
        %2004 = vmatprep.subr.mxu0 0.0
        %2005 = vmatpush2.msra.mxu0 0.0
        %2006 = vmatprep.subr.mxu0 0.0
        %2007 = vmatpush2.msra.mxu0 0.0
        %2008 = vmatprep.subr.mxu0 0.0
        %2009 = vmatpush2.msra.mxu0 0.0
        %2010 = vmatprep.mubr.f32.mxu0 0.0
        %2011 = vmatmul.mubr.f32.gmra.mxu0 %v1944
        %v2012 = vpop.f32.mrf.mxu0
        %v2013 = vadd.f32 %v1942, %v2012
        %v2014 = vpop.f32.mrf.mxu0
        %2015 = vdwg.mxu0
        %v2016 = vlaneseq
        %v2017 = vand.u32 %v2016, 127
        %vm2018 = vcmp.lt.s32.totalorder %v2017, 100
        %v2019 = vmin.f32 %v2013, 80.0
        %v2020 = vmul.f32 %v2019, 1.442695
        %v2021 = vpow.pop %v2020
        %v2022 = vadd.f32 %v2021, 1.0
        %v2023 = vsel %vm2018, %v2022, 0.0
        %vm2024 = vcmask 1040384
        %v2025 = vsel %vm2024, %v2023, 0.0
        %2026 = vadd.xlane.f32.xlu0 %v2025
        %v2027 = vpop.xlane.xlu0 %2026
        %v2028 = vrcp.pop %v2027
        %v2029 = vmul.f32 %v2023, %v2028
        %v2030 = vsel %vm2018, %v2029, 0.0
        %v2031 = vmul.f32 100.0, %v2028
        %v2032 = vsel %vm2024, %v2013, 0.0
        %2033 = vst [vmem:[%s540] sm:$0xff] %v2032
        %v2034 = vsel %vm2024, %v2030, 0.0
        %2035 = vst [vmem:[%s544] sm:$0xff] %v2034
        %v2036 = vsel %vm2024, %v2031, 0.0
        %2037 = vst [vmem:[%s548] sm:$0xff] %v2036
      $region72: #{vit_forward.1} parent=63 // pred_fallthru
        _
      %p2038 = scmp.lt.s32.totalorder %s29, 1
      %s2039 = scalar_select %p2038, %s29, 1
      %s2040 = smul.addr %s2039, 8
      %s2041 = scalar_lea.vmem %s11, %s2040
      %p2042 = scmp.lt.s32.totalorder %s29, 1
      %s2043 = scalar_select %p2042, %s29, 1
      %s2044 = smul.addr %s2043, 8
      %s2045 = scalar_lea.vmem %s12, %s2044
      %p2046 = scmp.lt.s32.totalorder %s29, 1
      %s2047 = scalar_select %p2046, %s29, 1
      %s2048 = smul.addr %s2047, 8
      %s2049 = scalar_lea.vmem %s13, %s2048
      // Predicated region
      $region73: #{vit_forward.1} parent=63 // pred_check
        %p2050 = pneg %p311
      $region74: #{vit_forward.1} parent=63 // pred_check_branch
        %2052 = sbr.rel (%p2050) target = $region76
      $region75: #{vit_forward.1} parent=63 // pred_region
        _
      $region76: #{vit_forward.1} parent=63 // pred_fallthru
        _
      // Predicated region
      $region77: #{vit_forward.1} parent=63 // pred_check
        %p2053 = pneg %p337
      $region78: #{vit_forward.1} parent=63 // pred_check_branch
        %2055 = sbr.rel (%p2053) target = $region80
      $region79: #{vit_forward.1} parent=63 // pred_region
        _
      $region80: #{vit_forward.1} parent=63 // pred_fallthru
        _
      // Predicated region
      $region81: #{vit_forward.1} parent=63 // pred_check
        %p2056 = pneg %p363
      $region82: #{vit_forward.1} parent=63 // pred_check_branch
        %2058 = sbr.rel (%p2056) target = $region84
      $region83: #{vit_forward.1} parent=63 // pred_region
        _
      $region84: #{vit_forward.1} parent=63 // pred_fallthru
        _
    $region64: #{vit_forward.1} parent=5 // pred_fallthru
      _
    %p2059 = scmp.le.s32.totalorder 2, %s20
    // Predicated region
    $region85: #{vit_forward.1} parent=5 // pred_check
      %p2060 = pneg %p2059
    $region86: #{vit_forward.1} parent=5 // pred_check_branch
      %2062 = sbr.rel (%p2060) target = $region88
    $region87: #{vit_forward.1} parent=5 // pred_region
      %s2063 = ssub.s32 %s20, 2
      // Predicated region
      $region89: #{vit_forward.1} parent=87 // pred_check
        %p2064 = pneg %p317
      $region90: #{vit_forward.1} parent=87 // pred_check_branch
        %2066 = sbr.rel (%p2064) target = $region92
      $region91: #{vit_forward.1} parent=87 // pred_region
        %p2067 = scmp.lt.s32.totalorder %s31, 1
        %s2068 = scalar_select %p2067, %s31, 1
        %s2069 = smul.addr %s2068, 8
        %s2070 = scalar_lea.vmem %s11, %s2069
      $region92: #{vit_forward.1} parent=87 // pred_fallthru
        _
      // Predicated region
      $region93: #{vit_forward.1} parent=87 // pred_check
        %p2071 = pneg %p343
      $region94: #{vit_forward.1} parent=87 // pred_check_branch
        %2073 = sbr.rel (%p2071) target = $region96
      $region95: #{vit_forward.1} parent=87 // pred_region
        %p2074 = scmp.lt.s32.totalorder %s31, 1
        %s2075 = scalar_select %p2074, %s31, 1
        %s2076 = smul.addr %s2075, 8
        %s2077 = scalar_lea.vmem %s12, %s2076
      $region96: #{vit_forward.1} parent=87 // pred_fallthru
        _
      // Predicated region
      $region97: #{vit_forward.1} parent=87 // pred_check
        %p2078 = pneg %p369
      $region98: #{vit_forward.1} parent=87 // pred_check_branch
        %2080 = sbr.rel (%p2078) target = $region100
      $region99: #{vit_forward.1} parent=87 // pred_region
        %p2081 = scmp.lt.s32.totalorder %s31, 1
        %s2082 = scalar_select %p2081, %s31, 1
        %s2083 = smul.addr %s2082, 8
        %s2084 = scalar_lea.vmem %s13, %s2083
      $region100: #{vit_forward.1} parent=87 // pred_fallthru
        _
    $region88: #{vit_forward.1} parent=5 // pred_fallthru
      _
  $region6: #{vit_forward.1} parent=0 // loop_footer
    %s24 = sadd.s32 1, %s20
  $region7: #{vit_forward.1} parent=0 // loop_footer_branch
    %19 = sbr.rel target = $region3
  $region8: #{vit_forward.1} parent=0 // loop_exit
    _

</llo_original>
